<compile_context>
chip_gen: v5e
topology: v5e:2x2
jax: 0.10.0
libtpu: 0.0.40
codegen_flags: <defaults>
</compile_context>

<pallas_src>
import math

import jax
import jax.numpy as jnp
from jax.experimental import pallas as pl
from jax.experimental.pallas import tpu as pltpu


def _round_up(x: int, m: int) -> int:
    return ((x + m - 1) // m) * m


def _rope_kernel(ids_ref, e_ref, freq_ref, offs_ref, out_ref):
    """Compute one block of rotary sin/cos rows.

    ids_ref : (fold_pad, r_blk) int32 -- folded position ids, token index along sublanes,
                                         output row index along lanes (transposed layout)
    e_ref   : (fold_pad, L) float32   -- 0/1 expansion matrix, E[t, l] = (l // rotary_dim == t)
    freq_ref: (1, L) float32          -- per-lane inverse frequency
    offs_ref: (1, L) float32          -- per-lane phase offset (0 for sin half, pi/2 for cos half)
    out_ref : (r_blk, L) float32
    """
    ids_f = ids_ref[...].astype(jnp.float32)               # exact for ids < 2**24
    # Expand ids across lanes on the (idle) MXU.  E is exactly 0/1, so the result is the
    # bit-exact f32 id value even through the MXU's multi-pass f32 matmul.
    pos = jax.lax.dot_general(
        ids_f, e_ref[...],
        dimension_numbers=(((0,), (0,)), ((), ())),        # contract the fold axis
        preferred_element_type=jnp.float32)                 # (r_blk, L)
    # phase = id * inv_freq (same f32 multiply as the table init) + {0, pi/2};
    # single EUP transcendental per element.
    out_ref[...] = jnp.sin(pos * freq_ref[...] + offs_ref[...])


def fixed_rotary_positional_embedding(position_ids: jnp.ndarray,
                                      rotary_dim: int,
                                      rotary_base: int = 10000,
                                      max_position: int = 16384,
                                      block_bytes: int = 2 * 1024 * 1024) -> jnp.ndarray:
    """Equivalent of FixedRotaryPositionalEmbedding(rotary_dim, ...).forward(position_ids)."""
    assert rotary_dim % 2 == 0, "rotary_dim must be even"
    half = rotary_dim // 2

    # Same inv_freq math as the PyTorch __init__.
    inv_freq = 1.0 / (
        rotary_base ** (jnp.arange(0, rotary_dim, 2, dtype=jnp.float32) / rotary_dim)
    )
    freq_feat = jnp.concatenate([inv_freq, inv_freq], axis=0)                 # (rotary_dim,)
    offs_feat = jnp.where(jnp.arange(rotary_dim) < half,
                          jnp.float32(0.0), jnp.float32(math.pi / 2.0))       # (rotary_dim,)

    # Lane-dense layout: L lanes hold `fold` consecutive tokens per output row.
    g = math.gcd(rotary_dim, 128)
    fold = 128 // g
    L = fold * rotary_dim                                                     # multiple of 128
    fold_pad = _round_up(max(fold, 8), 8)

    freq_lane = jnp.tile(freq_feat, fold).reshape(1, L).astype(jnp.float32)
    offs_lane = jnp.tile(offs_feat, fold).reshape(1, L).astype(jnp.float32)

    lane_tok = jnp.arange(L, dtype=jnp.int32) // rotary_dim                   # (L,)
    e_mat = (lane_tok[None, :] ==
             jnp.arange(fold_pad, dtype=jnp.int32)[:, None]).astype(jnp.float32)  # (fold_pad, L)

    # Flatten ids; nn.Embedding raises on out-of-range ids, clamp instead of reading garbage.
    ids_flat = jnp.clip(position_ids.reshape(-1).astype(jnp.int32), 0, max_position - 1)
    n = ids_flat.shape[0]
    rows = -(-n // fold)                                                      # ceil(n / fold)

    # Block sizing: ~block_bytes output tiles (amortize per-step overhead, stay well inside
    # the default scoped VMEM on v5e/v6e/v7x), balanced so the padded tail is small, and at
    # least 2 grid steps when there is enough work so v7x megacore can split the rows.
    rows_per_block = max(128, (block_bytes // (L * 4)) // 128 * 128)
    num_blocks = max(1, -(-rows // rows_per_block))
    if num_blocks == 1 and rows > 1024:
        num_blocks = 2
    r_blk = _round_up(-(-rows // num_blocks), 128)
    r_pad = r_blk * num_blocks
    n_pad = r_pad * fold

    ids_padded = jnp.zeros((n_pad,), jnp.int32).at[:n].set(ids_flat)
    # Transposed (fold_pad, r_pad): the long axis is lane-major, so the ids tile in VMEM is
    # ~fold_pad/L of the output tile instead of a 32x lane-padded blob.
    ids_t = jnp.zeros((fold_pad, r_pad), jnp.int32).at[:fold, :].set(
        ids_padded.reshape(r_pad, fold).T)

    out2d = pl.pallas_call(
        _rope_kernel,
        out_shape=jax.ShapeDtypeStruct((r_pad, L), jnp.float32),
        grid=(num_blocks,),
        in_specs=[
            pl.BlockSpec((fold_pad, r_blk), lambda i: (0, i)),   # ids chunk (lane-major)
            pl.BlockSpec((fold_pad, L), lambda i: (0, 0)),       # 0/1 expansion matrix
            pl.BlockSpec((1, L), lambda i: (0, 0)),              # per-lane inv_freq
            pl.BlockSpec((1, L), lambda i: (0, 0)),              # per-lane phase offset
        ],
        out_specs=pl.BlockSpec((r_blk, L), lambda i: (i, 0)),
        compiler_params=pltpu.CompilerParams(
            dimension_semantics=("parallel",),
            vmem_limit_bytes=32 * 1024 * 1024),
    )(ids_t, e_mat, freq_lane, offs_lane)

    # Unfold tokens from the lane axis and drop padding (wrapper-side plumbing only).
    out = out2d.reshape(n_pad, rotary_dim)[:n]
    return out.reshape(position_ids.shape + (rotary_dim,))


def make_rotary_table(rotary_dim: int, rotary_base: int = 10000,
                      max_position: int = 16384) -> jnp.ndarray:
    """Reference table, identical math to the PyTorch __init__ (used for checking)."""
    inv_freq = 1.0 / (
        rotary_base ** (jnp.arange(0, rotary_dim, 2, dtype=jnp.float32) / rotary_dim)
    )
    t = jnp.arange(max_position, dtype=jnp.float32)
    freqs = jnp.einsum("i,j->ij", t, inv_freq)
    return jnp.concatenate([jnp.sin(freqs), jnp.cos(freqs)], axis=-1)


if __name__ == "__main__":
    key = jax.random.PRNGKey(0)

    # Small, forward-consistent shapes: batch=2, seq=8, rotary_dim=32.
    rotary_dim = 32
    max_position = 128
    batch, seq = 2, 8

    position_ids = jax.random.randint(key, (batch, seq), 0, max_position, dtype=jnp.int32)

    out = fixed_rotary_positional_embedding(
        position_ids, rotary_dim, rotary_base=10000, max_position=max_position)
    out = jax.block_until_ready(out)

    # Reference: plain-JAX table lookup (== frozen nn.Embedding gather).
    table = make_rotary_table(rotary_dim, rotary_base=10000, max_position=max_position)
    ref = table[position_ids]

    assert out.shape == (batch, seq, rotary_dim), out.shape
    assert out.dtype == jnp.float32, out.dtype
    # Kernel evaluates sin(phase + pi/2) for the cos half on the EUP vs the XLA-built
    # table's cos(phase); allow a few ulps of the phase argument in tolerance.
    assert bool(jnp.allclose(out, ref, rtol=1e-5, atol=2e-5)), "mismatch vs reference gather"

    print("KERNEL_OK")
</pallas_src>

<mosaic_0001>
module attributes {stable_mosaic.version = 11 : i64} {
  func.func @_rope_kernel(%arg0: i32, %arg1: memref<8x128xi32, #tpu.memory_space<vmem>>, %arg2: memref<8x128xf32, #tpu.memory_space<vmem>>, %arg3: memref<1x128xf32, #tpu.memory_space<vmem>>, %arg4: memref<1x128xf32, #tpu.memory_space<vmem>>, %arg5: memref<128x128xf32, #tpu.memory_space<vmem>>) attributes {dimension_semantics = [#tpu.dimension_semantics<parallel>], iteration_bounds = array<i64: 1>, scalar_prefetch = 0 : i64, scratch_operands = 0 : i64, tpu.core_type = #tpu.core_type<tc>, window_params = [{transform_indices = @transform_0, window_bounds = array<i64: 8, 128>}, {pipeline_mode = #tpu.pipeline_mode<synchronous>, transform_indices = @transform_1, window_bounds = array<i64: 8, 128>}, {pipeline_mode = #tpu.pipeline_mode<synchronous>, transform_indices = @transform_2, window_bounds = array<i64: 1, 128>}, {pipeline_mode = #tpu.pipeline_mode<synchronous>, transform_indices = @transform_3, window_bounds = array<i64: 1, 128>}, {transform_indices = @transform_4, window_bounds = array<i64: 128, 128>}]} {
    %c0 = arith.constant 0 : index
    %c0_0 = arith.constant 0 : index
    %0 = vector.load %arg1[%c0, %c0_0] : memref<8x128xi32, #tpu.memory_space<vmem>>, vector<8x128xi32>
    %1 = arith.sitofp %0 : vector<8x128xi32> to vector<8x128xf32>
    %c0_1 = arith.constant 0 : index
    %c0_2 = arith.constant 0 : index
    %2 = vector.load %arg2[%c0_1, %c0_2] : memref<8x128xf32, #tpu.memory_space<vmem>>, vector<8x128xf32>
    %cst = arith.constant dense<0.000000e+00> : vector<128x128xf32>
    %3 = tpu.matmul %1, %2, %cst {dimension_numbers = #tpu.dot_dimension_numbers<[0], [0], [1], [1], [0, 1, 1, 1], [], []>} : vector<8x128xf32>, vector<8x128xf32>, vector<128x128xf32> -> vector<128x128xf32>
    %c0_3 = arith.constant 0 : index
    %c0_4 = arith.constant 0 : index
    %4 = vector.load %arg3[%c0_3, %c0_4] : memref<1x128xf32, #tpu.memory_space<vmem>>, vector<1x128xf32>
    %5 = vector.broadcast %4 : vector<1x128xf32> to vector<128x128xf32>
    %6 = arith.mulf %3, %5 : vector<128x128xf32>
    %c0_5 = arith.constant 0 : index
    %c0_6 = arith.constant 0 : index
    %7 = vector.load %arg4[%c0_5, %c0_6] : memref<1x128xf32, #tpu.memory_space<vmem>>, vector<1x128xf32>
    %8 = vector.broadcast %7 : vector<1x128xf32> to vector<128x128xf32>
    %9 = arith.addf %6, %8 : vector<128x128xf32>
    %10 = math.sin %9 : vector<128x128xf32>
    %c0_7 = arith.constant 0 : index
    %c0_8 = arith.constant 0 : index
    %11 = vector.load %arg5[%c0_7, %c0_8] : memref<128x128xf32, #tpu.memory_space<vmem>>, vector<128x128xf32>
    tpu.vector_store %arg5[%c0_7, %c0_8], %10 {strides = array<i32>} : memref<128x128xf32, #tpu.memory_space<vmem>>, vector<128x128xf32>,
    return
  }
  func.func @transform_0(%arg0: i32) -> (i32, i32) {
    %c0_i32 = arith.constant 0 : i32
    %c0_i32_0 = arith.constant 0 : i32
    return %c0_i32, %arg0 : i32, i32
  }
  func.func @transform_1(%arg0: i32) -> (i32, i32) {
    %c0_i32 = arith.constant 0 : i32
    %c0_i32_0 = arith.constant 0 : i32
    %c0_i32_1 = arith.constant 0 : i32
    return %c0_i32, %c0_i32_0 : i32, i32
  }
  func.func @transform_2(%arg0: i32) -> (i32, i32) {
    %c0_i32 = arith.constant 0 : i32
    %c0_i32_0 = arith.constant 0 : i32
    %c0_i32_1 = arith.constant 0 : i32
    return %c0_i32, %c0_i32_0 : i32, i32
  }
  func.func @transform_3(%arg0: i32) -> (i32, i32) {
    %c0_i32 = arith.constant 0 : i32
    %c0_i32_0 = arith.constant 0 : i32
    %c0_i32_1 = arith.constant 0 : i32
    return %c0_i32, %c0_i32_0 : i32, i32
  }
  func.func @transform_4(%arg0: i32) -> (i32, i32) {
    %c0_i32 = arith.constant 0 : i32
    %c0_i32_0 = arith.constant 0 : i32
    return %arg0, %c0_i32 : i32, i32
  }
}

</mosaic_0001>

<llo_original>
// kernel: tpu_custom_call.1
$region0: #{tpu_custom_call.1}
  #allocation0 [shape = 'u32[]', space=smem, size = 0x4, offset = 0x4, fixed_abs, tag = 'smem constant byte address 0x4 - core index']
  #allocation1 [shape = 'u32[72,128]{1,0:T(1,128)}', space=vmem, size = 0x9000, scoped, tag = 'internal scratch']
  %s0 = inlined_call_operand.hbm [shape: s32[8,128], index: 0, kind: input, shape index: {}]
  %s1 = inlined_call_operand.hbm [shape: f32[8,128], index: 1, kind: input, shape index: {}]
  %s2 = inlined_call_operand.vmem [shape: f32[1,128], index: 2, kind: input, shape index: {}]
  %s3 = inlined_call_operand.vmem [shape: f32[1,128], index: 3, kind: input, shape index: {}]
  %s4 = inlined_call_operand.hbm [shape: f32[128,128], index: 4, kind: output, shape index: {}]
  %s5 = sld [smem:[#allocation0]]
  $region34: #{tpu_custom_call.1} parent=0
    _
  %s7 = ssub.s32 1, %s5
  %s8 = scalar_select 0, %s7, %s5
  $region1: #{tpu_custom_call.1} parent=0
    #allocation2 [shape = 'u8[4096]{0}', space=vmem, size = 0x1000, scoped, tag = 'input window, operand 0, single buffered']
    #allocation3 [shape = 's32[1]{0}', space=sflag, size = 0x4, scoped, tag = 'scoped memory for tpu_custom_call.1']
    #allocation4 [shape = 's32[1]{0}', space=sflag, size = 0x4, scoped, tag = 'scoped memory for tpu_custom_call.1']
    #allocation5 [shape = 'u8[4096]{0}', space=vmem, size = 0x1000, scoped, tag = 'input window, operand 1, single buffered']
    #allocation6 [shape = 's32[1]{0}', space=sflag, size = 0x4, scoped, tag = 'scoped memory for tpu_custom_call.1']
    #allocation7 [shape = 'u8[65536]{0}', space=vmem, size = 0x10000, scoped, tag = 'output window, operand 0, single buffered']
    %9 = vsyncpa [#allocation3], 0
    %10 = vsyncpa [#allocation6], 0
    %11 = vsyncpa [#allocation4], 0
    // Predicated region
    $region2: #{tpu_custom_call.1} parent=1 // pred_check
      _
    $region3: #{tpu_custom_call.1} parent=1 // pred_check_branch
      %13 = sbr.rel (0) target = $region5
    $region4: #{tpu_custom_call.1} parent=1 // pred_region
      %15 = vsyncadd [#allocation3], 0
      %s17 = sshll.u32 %s0, 4
      %s18 = int_to_ptr.hbm [resolvable:$true] %s17
      %s19 = sshll.u32 [#allocation2], 4
      %s20 = int_to_ptr.vmem [resolvable:$true] %s19
      %22 = dma.hbm_to_vmem [thread:$0]  %s18, 128, %s20, [#allocation3]
    $region5: #{tpu_custom_call.1} parent=1 // pred_fallthru
      _
    // Predicated region
    $region6: #{tpu_custom_call.1} parent=1 // pred_check
      _
    $region7: #{tpu_custom_call.1} parent=1 // pred_check_branch
      %24 = sbr.rel (0) target = $region9
    $region8: #{tpu_custom_call.1} parent=1 // pred_region
      %26 = vsyncadd [#allocation6], 0
      %s28 = sshll.u32 %s1, 4
      %s29 = int_to_ptr.hbm [resolvable:$true] %s28
      %s30 = sshll.u32 [#allocation5], 4
      %s31 = int_to_ptr.vmem [resolvable:$true] %s30
      %33 = dma.hbm_to_vmem [thread:$0]  %s29, 128, %s31, [#allocation6]
    $region9: #{tpu_custom_call.1} parent=1 // pred_fallthru
      _
    // Predicated region
    $region10: #{tpu_custom_call.1} parent=1 // pred_check
      _
    $region11: #{tpu_custom_call.1} parent=1 // pred_check_branch
      %35 = sbr.rel (0) target = $region13
    $region12: #{tpu_custom_call.1} parent=1 // pred_region
      _
    $region13: #{tpu_custom_call.1} parent=1 // pred_fallthru
      _
    // Predicated region
    $region14: #{tpu_custom_call.1} parent=1 // pred_check
      _
    $region15: #{tpu_custom_call.1} parent=1 // pred_check_branch
      %37 = sbr.rel (0) target = $region17
    $region16: #{tpu_custom_call.1} parent=1 // pred_region
      _
    $region17: #{tpu_custom_call.1} parent=1 // pred_fallthru
      _
    // Predicated region
    $region18: #{tpu_custom_call.1} parent=1 // pred_check
      _
    $region19: #{tpu_custom_call.1} parent=1 // pred_check_branch
      %39 = sbr.rel (0) target = $region21
    $region20: #{tpu_custom_call.1} parent=1 // pred_region
      %41 = dma.done [#allocation3], 128
    $region21: #{tpu_custom_call.1} parent=1 // pred_fallthru
      _
    // Predicated region
    $region22: #{tpu_custom_call.1} parent=1 // pred_check
      _
    $region23: #{tpu_custom_call.1} parent=1 // pred_check_branch
      %43 = sbr.rel (0) target = $region25
    $region24: #{tpu_custom_call.1} parent=1 // pred_region
      %45 = dma.done [#allocation6], 128
    $region25: #{tpu_custom_call.1} parent=1 // pred_fallthru
      _
    %v46 = vld [vmem:[#allocation2] sm:$0xff]
    %v47 = vcvt.s32.f32 %v46
    %v48 = vld [vmem:[#allocation5] sm:$0xff]
    %49 = vxpose.xlu0.b32.start [1/16] %v47, 128
    %50 = vxpose.xlu0.b32.cont [2/16] 0.0, 128
    %51 = vxpose.xlu0.b32.cont [3/16] 0.0, 128
    %52 = vxpose.xlu0.b32.cont [4/16] 0.0, 128
    %53 = vxpose.xlu0.b32.cont [5/16] 0.0, 128
    %54 = vxpose.xlu0.b32.cont [6/16] 0.0, 128
    %55 = vxpose.xlu0.b32.cont [7/16] 0.0, 128
    %56 = vxpose.xlu0.b32.cont [8/16] 0.0, 128
    %57 = vxpose.xlu0.b32.cont [9/16] 0.0, 128
    %58 = vxpose.xlu0.b32.cont [10/16] 0.0, 128
    %59 = vxpose.xlu0.b32.cont [11/16] 0.0, 128
    %60 = vxpose.xlu0.b32.cont [12/16] 0.0, 128
    %61 = vxpose.xlu0.b32.cont [13/16] 0.0, 128
    %62 = vxpose.xlu0.b32.cont [14/16] 0.0, 128
    %63 = vxpose.xlu0.b32.cont [15/16] 0.0, 128
    %64 = vxpose.xlu0.b32.end [16/16] 0.0, 128
    %v65 = vpop.trf.xlu0
    %v66 = vpop.trf.xlu0
    %v67 = vpop.trf.xlu0
    %v68 = vpop.trf.xlu0
    %v69 = vpop.trf.xlu0
    %v70 = vpop.trf.xlu0
    %v71 = vpop.trf.xlu0
    %v72 = vpop.trf.xlu0
    %v73 = vpop.trf.xlu0
    %v74 = vpop.trf.xlu0
    %v75 = vpop.trf.xlu0
    %v76 = vpop.trf.xlu0
    %v77 = vpop.trf.xlu0
    %v78 = vpop.trf.xlu0
    %v79 = vpop.trf.xlu0
    %v80 = vpop.trf.xlu0
    %vm81 = vcmask 64512
    %v83 = vsel %vm81, %v65, 0
    %v86 = vsel %vm81, %v66, 0
    %v89 = vsel %vm81, %v67, 0
    %v92 = vsel %vm81, %v68, 0
    %v95 = vsel %vm81, %v69, 0
    %v98 = vsel %vm81, %v70, 0
    %v101 = vsel %vm81, %v71, 0
    %v104 = vsel %vm81, %v72, 0
    %v107 = vsel %vm81, %v73, 0
    %v110 = vsel %vm81, %v74, 0
    %v113 = vsel %vm81, %v75, 0
    %v116 = vsel %vm81, %v76, 0
    %v119 = vsel %vm81, %v77, 0
    %v122 = vsel %vm81, %v78, 0
    %v125 = vsel %vm81, %v79, 0
    %v128 = vsel %vm81, %v80, 0
    %130 = vmatpush.msra.mxu0 0.0
    %131 = vmatpush.msra.mxu0 0.0
    %132 = vmatpush.msra.mxu0 0.0
    %133 = vmatpush.msra.mxu0 0.0
    %134 = vmatpush.msra.mxu0 0.0
    %135 = vmatpush.msra.mxu0 0.0
    %136 = vmatpush.msra.mxu0 0.0
    %137 = vmatpush.msra.mxu0 0.0
    %138 = vmatpush.msra.mxu0 0.0
    %139 = vmatpush.msra.mxu0 0.0
    %140 = vmatpush.msra.mxu0 0.0
    %141 = vmatpush.msra.mxu0 0.0
    %142 = vmatpush.msra.mxu0 0.0
    %143 = vmatpush.msra.mxu0 0.0
    %144 = vmatpush.msra.mxu0 0.0
    %145 = vmatpush.msra.mxu0 %v48
    %146 = vmatmul.f32.gmra.mxu0 %v83
    %v147 = vpop.f32.mrf.mxu0
    %v148 = vadd.f32 0.0, %v147
    %149 = vmatmul.f32.gmra.mxu0 %v86
    %v150 = vpop.f32.mrf.mxu0
    %v151 = vadd.f32 0.0, %v150
    %152 = vmatmul.f32.gmra.mxu0 %v89
    %v153 = vpop.f32.mrf.mxu0
    %v154 = vadd.f32 0.0, %v153
    %155 = vmatmul.f32.gmra.mxu0 %v92
    %v156 = vpop.f32.mrf.mxu0
    %v157 = vadd.f32 0.0, %v156
    %158 = vmatmul.f32.gmra.mxu0 %v95
    %v159 = vpop.f32.mrf.mxu0
    %v160 = vadd.f32 0.0, %v159
    %161 = vmatmul.f32.gmra.mxu0 %v98
    %v162 = vpop.f32.mrf.mxu0
    %v163 = vadd.f32 0.0, %v162
    %164 = vmatmul.f32.gmra.mxu0 %v101
    %v165 = vpop.f32.mrf.mxu0
    %v166 = vadd.f32 0.0, %v165
    %167 = vmatmul.f32.gmra.mxu0 %v104
    %v168 = vpop.f32.mrf.mxu0
    %v169 = vadd.f32 0.0, %v168
    %170 = vmatmul.f32.gmra.mxu0 %v107
    %v171 = vpop.f32.mrf.mxu0
    %v172 = vadd.f32 0.0, %v171
    %173 = vmatmul.f32.gmra.mxu0 %v110
    %v174 = vpop.f32.mrf.mxu0
    %v175 = vadd.f32 0.0, %v174
    %176 = vmatmul.f32.gmra.mxu0 %v113
    %v177 = vpop.f32.mrf.mxu0
    %v178 = vadd.f32 0.0, %v177
    %179 = vmatmul.f32.gmra.mxu0 %v116
    %v180 = vpop.f32.mrf.mxu0
    %v181 = vadd.f32 0.0, %v180
    %182 = vmatmul.f32.gmra.mxu0 %v119
    %v183 = vpop.f32.mrf.mxu0
    %v184 = vadd.f32 0.0, %v183
    %185 = vmatmul.f32.gmra.mxu0 %v122
    %v186 = vpop.f32.mrf.mxu0
    %v187 = vadd.f32 0.0, %v186
    %188 = vmatmul.f32.gmra.mxu0 %v125
    %v189 = vpop.f32.mrf.mxu0
    %v190 = vadd.f32 0.0, %v189
    %191 = vmatmul.f32.gmra.mxu0 %v128
    %v192 = vpop.f32.mrf.mxu0
    %v193 = vadd.f32 0.0, %v192
    %194 = vdwg.mxu0
    %v195 = vld [vmem:[%s2] sm:$0x1]
    %v197 = vperm.slane %v195, 0
    %v199 = vmul.f32 %v148, %v197
    %v200 = vmul.f32 %v151, %v197
    %v201 = vmul.f32 %v154, %v197
    %v202 = vmul.f32 %v157, %v197
    %v203 = vmul.f32 %v160, %v197
    %v204 = vmul.f32 %v163, %v197
    %v205 = vmul.f32 %v166, %v197
    %v206 = vmul.f32 %v169, %v197
    %v207 = vmul.f32 %v172, %v197
    %v208 = vmul.f32 %v175, %v197
    %v209 = vmul.f32 %v178, %v197
    %v210 = vmul.f32 %v181, %v197
    %v211 = vmul.f32 %v184, %v197
    %v212 = vmul.f32 %v187, %v197
    %v213 = vmul.f32 %v190, %v197
    %v214 = vmul.f32 %v193, %v197
    %v215 = vld [vmem:[%s3] sm:$0x1]
    %v217 = vperm.slane %v215, 0
    %v219 = vadd.f32 %v199, %v217
    %v220 = vadd.f32 %v200, %v217
    %v221 = vadd.f32 %v201, %v217
    %v222 = vadd.f32 %v202, %v217
    %v223 = vadd.f32 %v203, %v217
    %v224 = vadd.f32 %v204, %v217
    %v225 = vadd.f32 %v205, %v217
    %v226 = vadd.f32 %v206, %v217
    %v227 = vadd.f32 %v207, %v217
    %v228 = vadd.f32 %v208, %v217
    %v229 = vadd.f32 %v209, %v217
    %v230 = vadd.f32 %v210, %v217
    %v231 = vadd.f32 %v211, %v217
    %v232 = vadd.f32 %v212, %v217
    %v233 = vadd.f32 %v213, %v217
    %v234 = vadd.f32 %v214, %v217
    %v235 = vand.u32 2147483647, %v219
    %vm236 = vcmp.le.f32.partialorder %v235, 0.7853982
    %vm237 = vcmp.lt.s32.totalorder %v219, 0
    %v238 = vand.u32 %v219, 2139095040
    %v239 = vshrl.u32 %v238, 23
    %v240 = vsub.s32 %v239, 127
    %v241 = vand.u32 2147483647, %v219
    %v242 = vand.u32 %v241, 8388607
    %v243 = vor.u32 %v242, 8388608
    %v244 = vsub.s32 0, %v243
    %v245 = vadd.s32 %v240, 1
    %vm246 = vcmp.gt.s32.totalorder %v245, 0
    %v247 = vsel %vm246, %v245, 0
    %v248 = vshrl.u32 %v247, 5
    %v249 = vand.u32 %v247, 31
    %v250 = vsub.s32 32, %v249
    %v251 = vshrl.u32 683565275, %v250
    %v252 = vshll.u32 683565275, %v249
    %v253 = vshrl.u32 2475754826, %v250
    %v254 = vor.u32 %v252, %v253
    %v255 = vshll.u32 2475754826, %v249
    %v256 = vshrl.u32 2131351028, %v250
    %v257 = vor.u32 %v255, %v256
    %v258 = vshll.u32 2131351028, %v249
    %v259 = vshrl.u32 2102212464, %v250
    %v260 = vor.u32 %v258, %v259
    %v261 = vshll.u32 2102212464, %v249
    %v262 = vshrl.u32 920167782, %v250
    %v263 = vor.u32 %v261, %v262
    %v264 = vshll.u32 920167782, %v249
    %v265 = vshrl.u32 1326507024, %v250
    %v266 = vor.u32 %v264, %v265
    %vm267 = vcmp.lt.s32.totalorder %v248, 1
    %vm268 = vcmp.lt.s32.totalorder %v248, 2
    %vm269 = vcmp.lt.s32.totalorder %v248, 3
    %vm270 = vcmp.lt.s32.totalorder %v248, 4
    %v271 = vsel %vm267, %v251, %v254
    %v272 = vsel %vm270, %v260, 2102212464
    %v273 = vsel %vm269, %v257, %v272
    %v274 = vsel %vm268, %v271, %v273
    %v275 = vsel %vm267, %v254, %v257
    %v276 = vsel %vm270, %v263, 920167782
    %v277 = vsel %vm269, %v260, %v276
    %v278 = vsel %vm268, %v275, %v277
    %v279 = vsel %vm267, %v257, %v260
    %v280 = vsel %vm270, %v266, 1326507024
    %v281 = vsel %vm269, %v263, %v280
    %v282 = vsel %vm268, %v279, %v281
    %v283 = vshll.u32 %v243, 8
    %v284 = vand.u32 %v283, 65535
    %v285 = vshrl.u32 %v283, 16
    %v286 = vand.u32 %v282, 65535
    %v287 = vshrl.u32 %v282, 16
    %v288 = vmul.u32 %v284, %v286
    %v289 = vmul.u32 %v284, %v287
    %v290 = vmul.u32 %v285, %v286
    %v291 = vmul.u32 %v285, %v287
    %v292 = vshll.u32 %v289, 16
    %v293 = vshrl.u32 %v289, 16
    %v294 = vshll.u32 %v290, 16
    %v295 = vshrl.u32 %v290, 16
    %vm296 = vc.u32 %v288, %v292
    %v297 = vsel %vm296, 1, 0
    %v298 = vadd.s32 %v288, %v292
    %v299 = vadd.s32 %v291, %v297
    %vm300 = vc.u32 %v298, %v294
    %v301 = vsel %vm300, 1, 0
    %v302 = vadd.s32 %v298, %v294
    %v303 = vadd.s32 %v299, %v301
    %v304 = vadd.s32 %v303, %v293
    %v305 = vadd.s32 %v304, %v295
    %v306 = vand.u32 %v283, 65535
    %v307 = vshrl.u32 %v283, 16
    %v308 = vand.u32 %v278, 65535
    %v309 = vshrl.u32 %v278, 16
    %v310 = vmul.u32 %v306, %v308
    %v311 = vmul.u32 %v306, %v309
    %v312 = vmul.u32 %v307, %v308
    %v313 = vmul.u32 %v307, %v309
    %v314 = vshll.u32 %v311, 16
    %v315 = vshrl.u32 %v311, 16
    %v316 = vshll.u32 %v312, 16
    %v317 = vshrl.u32 %v312, 16
    %vm318 = vc.u32 %v310, %v314
    %v319 = vsel %vm318, 1, 0
    %v320 = vadd.s32 %v310, %v314
    %v321 = vadd.s32 %v313, %v319
    %vm322 = vc.u32 %v320, %v316
    %v323 = vsel %vm322, 1, 0
    %v324 = vadd.s32 %v320, %v316
    %v325 = vadd.s32 %v321, %v323
    %v326 = vadd.s32 %v325, %v315
    %v327 = vadd.s32 %v326, %v317
    %v328 = vmul.u32 %v283, %v274
    %v329 = vadd.s32 %v305, %v324
    %vm330 = vc.u32 %v305, %v324
    %v331 = vadd.s32 %v327, 1
    %v332 = vsel %vm330, %v331, %v327
    %v333 = vadd.s32 %v328, %v332
    %v334 = vadd.s32 %v333, 536870912
    %v335 = vshrl.u32 %v334, 30
    %v336 = vshll.u32 %v335, 30
    %v337 = vsub.s32 %v333, %v336
    %vm338 = vcmp.lt.s32.totalorder %v337, 0
    %v339 = vsub.s32 0, %v337
    %v340 = vsel %vm338, %v339, %v337
    %v341 = vclz %v340
    %v342 = vsub.s32 %v341, 2
    %vm343 = vcmp.gt.s32.totalorder 0, %v342
    %v344 = vsel %vm343, 0, %v342
    %v345 = vsub.s32 32, %v344
    %v346 = vshll.u32 %v337, %v344
    %v347 = vshrl.u32 %v329, %v345
    %v348 = vor.u32 %v346, %v347
    %v349 = vsub.s32 4294967266, %v344
    %v350 = vadd.s32 %v349, 127
    %v351 = vshll.u32 %v350, 23
    %v352 = vor.u32 4788187, %v351
    %v353 = vand.u32 2147483647, %v352
    %v355 = vcvt.s32.f32 %v348
    %v356 = vmul.f32 %v355, %v353
    %v357 = vxor.u32 %v356, 2147483648
    %v358 = vsel %vm237, %v357, %v356
    %v359 = vsub.s32 4, %v335
    %v360 = vsel %vm237, %v359, %v335
    %v361 = vsel %vm236, %v219, %v358
    %v362 = vsel %vm236, 0, %v360
    %v363 = vmul.f32 %v361, %v361
    %v364 = vmul.f32 %v363, -0.001358992
    %v365 = vadd.f32 %v364, 0.041655596
    %v366 = vmul.f32 %v363, %v365
    %v367 = vadd.f32 %v366, -0.4999988
    %v368 = vmul.f32 %v363, %v367
    %v369 = vadd.f32 1.0, %v368
    %v370 = vmul.f32 %v361, %v361
    %v371 = vmul.f32 %v370, -0.00019511016
    %v372 = vadd.f32 %v371, 0.008332121
    %v373 = vmul.f32 %v370, %v372
    %v374 = vadd.f32 %v373, -0.16666654
    %v375 = vmul.f32 %v370, %v374
    %v376 = vadd.f32 %v375, 1.0
    %v377 = vmul.f32 %v376, %v361
    %vm378 = vweird.f32 %v219
    %v379 = vadd.s32 %v362, 3
    %v380 = vand.u32 %v379, 3
    %vm381 = vcmp.lt.s32.totalorder %v380, 2
    %vm382 = vcmp.eq.s32.totalorder %v380, 0
    %v383 = vxor.u32 %v377, 2147483648
    %v384 = vsel %vm382, %v369, %v383
    %vm385 = vcmp.eq.s32.totalorder %v380, 2
    %v386 = vxor.u32 %v369, 2147483648
    %v387 = vsel %vm385, %v386, %v377
    %v388 = vsel %vm381, %v384, %v387
    %v389 = vsel %vm378, nan, %v388
    %v390 = vand.u32 2147483647, %v220
    %vm391 = vcmp.le.f32.partialorder %v390, 0.7853982
    %vm392 = vcmp.lt.s32.totalorder %v220, 0
    %v393 = vand.u32 %v220, 2139095040
    %v394 = vshrl.u32 %v393, 23
    %v395 = vsub.s32 %v394, 127
    %v396 = vand.u32 2147483647, %v220
    %v397 = vand.u32 %v396, 8388607
    %v398 = vor.u32 %v397, 8388608
    %v399 = vsub.s32 0, %v398
    %v400 = vadd.s32 %v395, 1
    %vm401 = vcmp.gt.s32.totalorder %v400, 0
    %v402 = vsel %vm401, %v400, 0
    %v403 = vshrl.u32 %v402, 5
    %v404 = vand.u32 %v402, 31
    %v405 = vsub.s32 32, %v404
    %v406 = vshrl.u32 683565275, %v405
    %v407 = vshll.u32 683565275, %v404
    %v408 = vshrl.u32 2475754826, %v405
    %v409 = vor.u32 %v407, %v408
    %v410 = vshll.u32 2475754826, %v404
    %v411 = vshrl.u32 2131351028, %v405
    %v412 = vor.u32 %v410, %v411
    %v413 = vshll.u32 2131351028, %v404
    %v414 = vshrl.u32 2102212464, %v405
    %v415 = vor.u32 %v413, %v414
    %v416 = vshll.u32 2102212464, %v404
    %v417 = vshrl.u32 920167782, %v405
    %v418 = vor.u32 %v416, %v417
    %v419 = vshll.u32 920167782, %v404
    %v420 = vshrl.u32 1326507024, %v405
    %v421 = vor.u32 %v419, %v420
    %vm422 = vcmp.lt.s32.totalorder %v403, 1
    %vm423 = vcmp.lt.s32.totalorder %v403, 2
    %vm424 = vcmp.lt.s32.totalorder %v403, 3
    %vm425 = vcmp.lt.s32.totalorder %v403, 4
    %v426 = vsel %vm422, %v406, %v409
    %v427 = vsel %vm425, %v415, 2102212464
    %v428 = vsel %vm424, %v412, %v427
    %v429 = vsel %vm423, %v426, %v428
    %v430 = vsel %vm422, %v409, %v412
    %v431 = vsel %vm425, %v418, 920167782
    %v432 = vsel %vm424, %v415, %v431
    %v433 = vsel %vm423, %v430, %v432
    %v434 = vsel %vm422, %v412, %v415
    %v435 = vsel %vm425, %v421, 1326507024
    %v436 = vsel %vm424, %v418, %v435
    %v437 = vsel %vm423, %v434, %v436
    %v438 = vshll.u32 %v398, 8
    %v439 = vand.u32 %v438, 65535
    %v440 = vshrl.u32 %v438, 16
    %v441 = vand.u32 %v437, 65535
    %v442 = vshrl.u32 %v437, 16
    %v443 = vmul.u32 %v439, %v441
    %v444 = vmul.u32 %v439, %v442
    %v445 = vmul.u32 %v440, %v441
    %v446 = vmul.u32 %v440, %v442
    %v447 = vshll.u32 %v444, 16
    %v448 = vshrl.u32 %v444, 16
    %v449 = vshll.u32 %v445, 16
    %v450 = vshrl.u32 %v445, 16
    %vm451 = vc.u32 %v443, %v447
    %v452 = vsel %vm451, 1, 0
    %v453 = vadd.s32 %v443, %v447
    %v454 = vadd.s32 %v446, %v452
    %vm455 = vc.u32 %v453, %v449
    %v456 = vsel %vm455, 1, 0
    %v457 = vadd.s32 %v453, %v449
    %v458 = vadd.s32 %v454, %v456
    %v459 = vadd.s32 %v458, %v448
    %v460 = vadd.s32 %v459, %v450
    %v461 = vand.u32 %v438, 65535
    %v462 = vshrl.u32 %v438, 16
    %v463 = vand.u32 %v433, 65535
    %v464 = vshrl.u32 %v433, 16
    %v465 = vmul.u32 %v461, %v463
    %v466 = vmul.u32 %v461, %v464
    %v467 = vmul.u32 %v462, %v463
    %v468 = vmul.u32 %v462, %v464
    %v469 = vshll.u32 %v466, 16
    %v470 = vshrl.u32 %v466, 16
    %v471 = vshll.u32 %v467, 16
    %v472 = vshrl.u32 %v467, 16
    %vm473 = vc.u32 %v465, %v469
    %v474 = vsel %vm473, 1, 0
    %v475 = vadd.s32 %v465, %v469
    %v476 = vadd.s32 %v468, %v474
    %vm477 = vc.u32 %v475, %v471
    %v478 = vsel %vm477, 1, 0
    %v479 = vadd.s32 %v475, %v471
    %v480 = vadd.s32 %v476, %v478
    %v481 = vadd.s32 %v480, %v470
    %v482 = vadd.s32 %v481, %v472
    %v483 = vmul.u32 %v438, %v429
    %v484 = vadd.s32 %v460, %v479
    %vm485 = vc.u32 %v460, %v479
    %v486 = vadd.s32 %v482, 1
    %v487 = vsel %vm485, %v486, %v482
    %v488 = vadd.s32 %v483, %v487
    %v489 = vadd.s32 %v488, 536870912
    %v490 = vshrl.u32 %v489, 30
    %v491 = vshll.u32 %v490, 30
    %v492 = vsub.s32 %v488, %v491
    %vm493 = vcmp.lt.s32.totalorder %v492, 0
    %v494 = vsub.s32 0, %v492
    %v495 = vsel %vm493, %v494, %v492
    %v496 = vclz %v495
    %v497 = vsub.s32 %v496, 2
    %vm498 = vcmp.gt.s32.totalorder 0, %v497
    %v499 = vsel %vm498, 0, %v497
    %v500 = vsub.s32 32, %v499
    %v501 = vshll.u32 %v492, %v499
    %v502 = vshrl.u32 %v484, %v500
    %v503 = vor.u32 %v501, %v502
    %v504 = vsub.s32 4294967266, %v499
    %v505 = vadd.s32 %v504, 127
    %v506 = vshll.u32 %v505, 23
    %v507 = vor.u32 4788187, %v506
    %v508 = vand.u32 2147483647, %v507
    %v510 = vcvt.s32.f32 %v503
    %v511 = vmul.f32 %v510, %v508
    %v512 = vxor.u32 %v511, 2147483648
    %v513 = vsel %vm392, %v512, %v511
    %v514 = vsub.s32 4, %v490
    %v515 = vsel %vm392, %v514, %v490
    %v516 = vsel %vm391, %v220, %v513
    %v517 = vsel %vm391, 0, %v515
    %v518 = vmul.f32 %v516, %v516
    %v519 = vmul.f32 %v518, -0.001358992
    %v520 = vadd.f32 %v519, 0.041655596
    %v521 = vmul.f32 %v518, %v520
    %v522 = vadd.f32 %v521, -0.4999988
    %v523 = vmul.f32 %v518, %v522
    %v524 = vadd.f32 1.0, %v523
    %v525 = vmul.f32 %v516, %v516
    %v526 = vmul.f32 %v525, -0.00019511016
    %v527 = vadd.f32 %v526, 0.008332121
    %v528 = vmul.f32 %v525, %v527
    %v529 = vadd.f32 %v528, -0.16666654
    %v530 = vmul.f32 %v525, %v529
    %v531 = vadd.f32 %v530, 1.0
    %v532 = vmul.f32 %v531, %v516
    %vm533 = vweird.f32 %v220
    %v534 = vadd.s32 %v517, 3
    %v535 = vand.u32 %v534, 3
    %vm536 = vcmp.lt.s32.totalorder %v535, 2
    %vm537 = vcmp.eq.s32.totalorder %v535, 0
    %v538 = vxor.u32 %v532, 2147483648
    %v539 = vsel %vm537, %v524, %v538
    %vm540 = vcmp.eq.s32.totalorder %v535, 2
    %v541 = vxor.u32 %v524, 2147483648
    %v542 = vsel %vm540, %v541, %v532
    %v543 = vsel %vm536, %v539, %v542
    %v544 = vsel %vm533, nan, %v543
    %v545 = vand.u32 2147483647, %v221
    %vm546 = vcmp.le.f32.partialorder %v545, 0.7853982
    %vm547 = vcmp.lt.s32.totalorder %v221, 0
    %v548 = vand.u32 %v221, 2139095040
    %v549 = vshrl.u32 %v548, 23
    %v550 = vsub.s32 %v549, 127
    %v551 = vand.u32 2147483647, %v221
    %v552 = vand.u32 %v551, 8388607
    %v553 = vor.u32 %v552, 8388608
    %v554 = vsub.s32 0, %v553
    %v555 = vadd.s32 %v550, 1
    %vm556 = vcmp.gt.s32.totalorder %v555, 0
    %v557 = vsel %vm556, %v555, 0
    %v558 = vshrl.u32 %v557, 5
    %v559 = vand.u32 %v557, 31
    %v560 = vsub.s32 32, %v559
    %v561 = vshrl.u32 683565275, %v560
    %v562 = vshll.u32 683565275, %v559
    %v563 = vshrl.u32 2475754826, %v560
    %v564 = vor.u32 %v562, %v563
    %v565 = vshll.u32 2475754826, %v559
    %v566 = vshrl.u32 2131351028, %v560
    %v567 = vor.u32 %v565, %v566
    %v568 = vshll.u32 2131351028, %v559
    %v569 = vshrl.u32 2102212464, %v560
    %v570 = vor.u32 %v568, %v569
    %v571 = vshll.u32 2102212464, %v559
    %v572 = vshrl.u32 920167782, %v560
    %v573 = vor.u32 %v571, %v572
    %v574 = vshll.u32 920167782, %v559
    %v575 = vshrl.u32 1326507024, %v560
    %v576 = vor.u32 %v574, %v575
    %vm577 = vcmp.lt.s32.totalorder %v558, 1
    %vm578 = vcmp.lt.s32.totalorder %v558, 2
    %vm579 = vcmp.lt.s32.totalorder %v558, 3
    %vm580 = vcmp.lt.s32.totalorder %v558, 4
    %v581 = vsel %vm577, %v561, %v564
    %v582 = vsel %vm580, %v570, 2102212464
    %v583 = vsel %vm579, %v567, %v582
    %v584 = vsel %vm578, %v581, %v583
    %v585 = vsel %vm577, %v564, %v567
    %v586 = vsel %vm580, %v573, 920167782
    %v587 = vsel %vm579, %v570, %v586
    %v588 = vsel %vm578, %v585, %v587
    %v589 = vsel %vm577, %v567, %v570
    %v590 = vsel %vm580, %v576, 1326507024
    %v591 = vsel %vm579, %v573, %v590
    %v592 = vsel %vm578, %v589, %v591
    %v593 = vshll.u32 %v553, 8
    %v594 = vand.u32 %v593, 65535
    %v595 = vshrl.u32 %v593, 16
    %v596 = vand.u32 %v592, 65535
    %v597 = vshrl.u32 %v592, 16
    %v598 = vmul.u32 %v594, %v596
    %v599 = vmul.u32 %v594, %v597
    %v600 = vmul.u32 %v595, %v596
    %v601 = vmul.u32 %v595, %v597
    %v602 = vshll.u32 %v599, 16
    %v603 = vshrl.u32 %v599, 16
    %v604 = vshll.u32 %v600, 16
    %v605 = vshrl.u32 %v600, 16
    %vm606 = vc.u32 %v598, %v602
    %v607 = vsel %vm606, 1, 0
    %v608 = vadd.s32 %v598, %v602
    %v609 = vadd.s32 %v601, %v607
    %vm610 = vc.u32 %v608, %v604
    %v611 = vsel %vm610, 1, 0
    %v612 = vadd.s32 %v608, %v604
    %v613 = vadd.s32 %v609, %v611
    %v614 = vadd.s32 %v613, %v603
    %v615 = vadd.s32 %v614, %v605
    %v616 = vand.u32 %v593, 65535
    %v617 = vshrl.u32 %v593, 16
    %v618 = vand.u32 %v588, 65535
    %v619 = vshrl.u32 %v588, 16
    %v620 = vmul.u32 %v616, %v618
    %v621 = vmul.u32 %v616, %v619
    %v622 = vmul.u32 %v617, %v618
    %v623 = vmul.u32 %v617, %v619
    %v624 = vshll.u32 %v621, 16
    %v625 = vshrl.u32 %v621, 16
    %v626 = vshll.u32 %v622, 16
    %v627 = vshrl.u32 %v622, 16
    %vm628 = vc.u32 %v620, %v624
    %v629 = vsel %vm628, 1, 0
    %v630 = vadd.s32 %v620, %v624
    %v631 = vadd.s32 %v623, %v629
    %vm632 = vc.u32 %v630, %v626
    %v633 = vsel %vm632, 1, 0
    %v634 = vadd.s32 %v630, %v626
    %v635 = vadd.s32 %v631, %v633
    %v636 = vadd.s32 %v635, %v625
    %v637 = vadd.s32 %v636, %v627
    %v638 = vmul.u32 %v593, %v584
    %v639 = vadd.s32 %v615, %v634
    %vm640 = vc.u32 %v615, %v634
    %v641 = vadd.s32 %v637, 1
    %v642 = vsel %vm640, %v641, %v637
    %v643 = vadd.s32 %v638, %v642
    %v644 = vadd.s32 %v643, 536870912
    %v645 = vshrl.u32 %v644, 30
    %v646 = vshll.u32 %v645, 30
    %v647 = vsub.s32 %v643, %v646
    %vm648 = vcmp.lt.s32.totalorder %v647, 0
    %v649 = vsub.s32 0, %v647
    %v650 = vsel %vm648, %v649, %v647
    %v651 = vclz %v650
    %v652 = vsub.s32 %v651, 2
    %vm653 = vcmp.gt.s32.totalorder 0, %v652
    %v654 = vsel %vm653, 0, %v652
    %v655 = vsub.s32 32, %v654
    %v656 = vshll.u32 %v647, %v654
    %v657 = vshrl.u32 %v639, %v655
    %v658 = vor.u32 %v656, %v657
    %v659 = vsub.s32 4294967266, %v654
    %v660 = vadd.s32 %v659, 127
    %v661 = vshll.u32 %v660, 23
    %v662 = vor.u32 4788187, %v661
    %v663 = vand.u32 2147483647, %v662
    %v665 = vcvt.s32.f32 %v658
    %v666 = vmul.f32 %v665, %v663
    %v667 = vxor.u32 %v666, 2147483648
    %v668 = vsel %vm547, %v667, %v666
    %v669 = vsub.s32 4, %v645
    %v670 = vsel %vm547, %v669, %v645
    %v671 = vsel %vm546, %v221, %v668
    %v672 = vsel %vm546, 0, %v670
    %v673 = vmul.f32 %v671, %v671
    %v674 = vmul.f32 %v673, -0.001358992
    %v675 = vadd.f32 %v674, 0.041655596
    %v676 = vmul.f32 %v673, %v675
    %v677 = vadd.f32 %v676, -0.4999988
    %v678 = vmul.f32 %v673, %v677
    %v679 = vadd.f32 1.0, %v678
    %v680 = vmul.f32 %v671, %v671
    %v681 = vmul.f32 %v680, -0.00019511016
    %v682 = vadd.f32 %v681, 0.008332121
    %v683 = vmul.f32 %v680, %v682
    %v684 = vadd.f32 %v683, -0.16666654
    %v685 = vmul.f32 %v680, %v684
    %v686 = vadd.f32 %v685, 1.0
    %v687 = vmul.f32 %v686, %v671
    %vm688 = vweird.f32 %v221
    %v689 = vadd.s32 %v672, 3
    %v690 = vand.u32 %v689, 3
    %vm691 = vcmp.lt.s32.totalorder %v690, 2
    %vm692 = vcmp.eq.s32.totalorder %v690, 0
    %v693 = vxor.u32 %v687, 2147483648
    %v694 = vsel %vm692, %v679, %v693
    %vm695 = vcmp.eq.s32.totalorder %v690, 2
    %v696 = vxor.u32 %v679, 2147483648
    %v697 = vsel %vm695, %v696, %v687
    %v698 = vsel %vm691, %v694, %v697
    %v699 = vsel %vm688, nan, %v698
    %v700 = vand.u32 2147483647, %v222
    %vm701 = vcmp.le.f32.partialorder %v700, 0.7853982
    %vm702 = vcmp.lt.s32.totalorder %v222, 0
    %v703 = vand.u32 %v222, 2139095040
    %v704 = vshrl.u32 %v703, 23
    %v705 = vsub.s32 %v704, 127
    %v706 = vand.u32 2147483647, %v222
    %v707 = vand.u32 %v706, 8388607
    %v708 = vor.u32 %v707, 8388608
    %v709 = vsub.s32 0, %v708
    %v710 = vadd.s32 %v705, 1
    %vm711 = vcmp.gt.s32.totalorder %v710, 0
    %v712 = vsel %vm711, %v710, 0
    %v713 = vshrl.u32 %v712, 5
    %v714 = vand.u32 %v712, 31
    %v715 = vsub.s32 32, %v714
    %v716 = vshrl.u32 683565275, %v715
    %v717 = vshll.u32 683565275, %v714
    %v718 = vshrl.u32 2475754826, %v715
    %v719 = vor.u32 %v717, %v718
    %v720 = vshll.u32 2475754826, %v714
    %v721 = vshrl.u32 2131351028, %v715
    %v722 = vor.u32 %v720, %v721
    %v723 = vshll.u32 2131351028, %v714
    %v724 = vshrl.u32 2102212464, %v715
    %v725 = vor.u32 %v723, %v724
    %v726 = vshll.u32 2102212464, %v714
    %v727 = vshrl.u32 920167782, %v715
    %v728 = vor.u32 %v726, %v727
    %v729 = vshll.u32 920167782, %v714
    %v730 = vshrl.u32 1326507024, %v715
    %v731 = vor.u32 %v729, %v730
    %vm732 = vcmp.lt.s32.totalorder %v713, 1
    %vm733 = vcmp.lt.s32.totalorder %v713, 2
    %vm734 = vcmp.lt.s32.totalorder %v713, 3
    %vm735 = vcmp.lt.s32.totalorder %v713, 4
    %v736 = vsel %vm732, %v716, %v719
    %v737 = vsel %vm735, %v725, 2102212464
    %v738 = vsel %vm734, %v722, %v737
    %v739 = vsel %vm733, %v736, %v738
    %v740 = vsel %vm732, %v719, %v722
    %v741 = vsel %vm735, %v728, 920167782
    %v742 = vsel %vm734, %v725, %v741
    %v743 = vsel %vm733, %v740, %v742
    %v744 = vsel %vm732, %v722, %v725
    %v745 = vsel %vm735, %v731, 1326507024
    %v746 = vsel %vm734, %v728, %v745
    %v747 = vsel %vm733, %v744, %v746
    %v748 = vshll.u32 %v708, 8
    %v749 = vand.u32 %v748, 65535
    %v750 = vshrl.u32 %v748, 16
    %v751 = vand.u32 %v747, 65535
    %v752 = vshrl.u32 %v747, 16
    %v753 = vmul.u32 %v749, %v751
    %v754 = vmul.u32 %v749, %v752
    %v755 = vmul.u32 %v750, %v751
    %v756 = vmul.u32 %v750, %v752
    %v757 = vshll.u32 %v754, 16
    %v758 = vshrl.u32 %v754, 16
    %v759 = vshll.u32 %v755, 16
    %v760 = vshrl.u32 %v755, 16
    %vm761 = vc.u32 %v753, %v757
    %v762 = vsel %vm761, 1, 0
    %v763 = vadd.s32 %v753, %v757
    %v764 = vadd.s32 %v756, %v762
    %vm765 = vc.u32 %v763, %v759
    %v766 = vsel %vm765, 1, 0
    %v767 = vadd.s32 %v763, %v759
    %v768 = vadd.s32 %v764, %v766
    %v769 = vadd.s32 %v768, %v758
    %v770 = vadd.s32 %v769, %v760
    %v771 = vand.u32 %v748, 65535
    %v772 = vshrl.u32 %v748, 16
    %v773 = vand.u32 %v743, 65535
    %v774 = vshrl.u32 %v743, 16
    %v775 = vmul.u32 %v771, %v773
    %v776 = vmul.u32 %v771, %v774
    %v777 = vmul.u32 %v772, %v773
    %v778 = vmul.u32 %v772, %v774
    %v779 = vshll.u32 %v776, 16
    %v780 = vshrl.u32 %v776, 16
    %v781 = vshll.u32 %v777, 16
    %v782 = vshrl.u32 %v777, 16
    %vm783 = vc.u32 %v775, %v779
    %v784 = vsel %vm783, 1, 0
    %v785 = vadd.s32 %v775, %v779
    %v786 = vadd.s32 %v778, %v784
    %vm787 = vc.u32 %v785, %v781
    %v788 = vsel %vm787, 1, 0
    %v789 = vadd.s32 %v785, %v781
    %v790 = vadd.s32 %v786, %v788
    %v791 = vadd.s32 %v790, %v780
    %v792 = vadd.s32 %v791, %v782
    %v793 = vmul.u32 %v748, %v739
    %v794 = vadd.s32 %v770, %v789
    %vm795 = vc.u32 %v770, %v789
    %v796 = vadd.s32 %v792, 1
    %v797 = vsel %vm795, %v796, %v792
    %v798 = vadd.s32 %v793, %v797
    %v799 = vadd.s32 %v798, 536870912
    %v800 = vshrl.u32 %v799, 30
    %v801 = vshll.u32 %v800, 30
    %v802 = vsub.s32 %v798, %v801
    %vm803 = vcmp.lt.s32.totalorder %v802, 0
    %v804 = vsub.s32 0, %v802
    %v805 = vsel %vm803, %v804, %v802
    %v806 = vclz %v805
    %v807 = vsub.s32 %v806, 2
    %vm808 = vcmp.gt.s32.totalorder 0, %v807
    %v809 = vsel %vm808, 0, %v807
    %v810 = vsub.s32 32, %v809
    %v811 = vshll.u32 %v802, %v809
    %v812 = vshrl.u32 %v794, %v810
    %v813 = vor.u32 %v811, %v812
    %v814 = vsub.s32 4294967266, %v809
    %v815 = vadd.s32 %v814, 127
    %v816 = vshll.u32 %v815, 23
    %v817 = vor.u32 4788187, %v816
    %v818 = vand.u32 2147483647, %v817
    %v820 = vcvt.s32.f32 %v813
    %v821 = vmul.f32 %v820, %v818
    %v822 = vxor.u32 %v821, 2147483648
    %v823 = vsel %vm702, %v822, %v821
    %v824 = vsub.s32 4, %v800
    %v825 = vsel %vm702, %v824, %v800
    %v826 = vsel %vm701, %v222, %v823
    %v827 = vsel %vm701, 0, %v825
    %v828 = vmul.f32 %v826, %v826
    %v829 = vmul.f32 %v828, -0.001358992
    %v830 = vadd.f32 %v829, 0.041655596
    %v831 = vmul.f32 %v828, %v830
    %v832 = vadd.f32 %v831, -0.4999988
    %v833 = vmul.f32 %v828, %v832
    %v834 = vadd.f32 1.0, %v833
    %v835 = vmul.f32 %v826, %v826
    %v836 = vmul.f32 %v835, -0.00019511016
    %v837 = vadd.f32 %v836, 0.008332121
    %v838 = vmul.f32 %v835, %v837
    %v839 = vadd.f32 %v838, -0.16666654
    %v840 = vmul.f32 %v835, %v839
    %v841 = vadd.f32 %v840, 1.0
    %v842 = vmul.f32 %v841, %v826
    %vm843 = vweird.f32 %v222
    %v844 = vadd.s32 %v827, 3
    %v845 = vand.u32 %v844, 3
    %vm846 = vcmp.lt.s32.totalorder %v845, 2
    %vm847 = vcmp.eq.s32.totalorder %v845, 0
    %v848 = vxor.u32 %v842, 2147483648
    %v849 = vsel %vm847, %v834, %v848
    %vm850 = vcmp.eq.s32.totalorder %v845, 2
    %v851 = vxor.u32 %v834, 2147483648
    %v852 = vsel %vm850, %v851, %v842
    %v853 = vsel %vm846, %v849, %v852
    %v854 = vsel %vm843, nan, %v853
    %v855 = vand.u32 2147483647, %v223
    %vm856 = vcmp.le.f32.partialorder %v855, 0.7853982
    %vm857 = vcmp.lt.s32.totalorder %v223, 0
    %v858 = vand.u32 %v223, 2139095040
    %v859 = vshrl.u32 %v858, 23
    %v860 = vsub.s32 %v859, 127
    %v861 = vand.u32 2147483647, %v223
    %v862 = vand.u32 %v861, 8388607
    %v863 = vor.u32 %v862, 8388608
    %v864 = vsub.s32 0, %v863
    %v865 = vadd.s32 %v860, 1
    %vm866 = vcmp.gt.s32.totalorder %v865, 0
    %v867 = vsel %vm866, %v865, 0
    %v868 = vshrl.u32 %v867, 5
    %v869 = vand.u32 %v867, 31
    %v870 = vsub.s32 32, %v869
    %v871 = vshrl.u32 683565275, %v870
    %v872 = vshll.u32 683565275, %v869
    %v873 = vshrl.u32 2475754826, %v870
    %v874 = vor.u32 %v872, %v873
    %v875 = vshll.u32 2475754826, %v869
    %v876 = vshrl.u32 2131351028, %v870
    %v877 = vor.u32 %v875, %v876
    %v878 = vshll.u32 2131351028, %v869
    %v879 = vshrl.u32 2102212464, %v870
    %v880 = vor.u32 %v878, %v879
    %v881 = vshll.u32 2102212464, %v869
    %v882 = vshrl.u32 920167782, %v870
    %v883 = vor.u32 %v881, %v882
    %v884 = vshll.u32 920167782, %v869
    %v885 = vshrl.u32 1326507024, %v870
    %v886 = vor.u32 %v884, %v885
    %vm887 = vcmp.lt.s32.totalorder %v868, 1
    %vm888 = vcmp.lt.s32.totalorder %v868, 2
    %vm889 = vcmp.lt.s32.totalorder %v868, 3
    %vm890 = vcmp.lt.s32.totalorder %v868, 4
    %v891 = vsel %vm887, %v871, %v874
    %v892 = vsel %vm890, %v880, 2102212464
    %v893 = vsel %vm889, %v877, %v892
    %v894 = vsel %vm888, %v891, %v893
    %v895 = vsel %vm887, %v874, %v877
    %v896 = vsel %vm890, %v883, 920167782
    %v897 = vsel %vm889, %v880, %v896
    %v898 = vsel %vm888, %v895, %v897
    %v899 = vsel %vm887, %v877, %v880
    %v900 = vsel %vm890, %v886, 1326507024
    %v901 = vsel %vm889, %v883, %v900
    %v902 = vsel %vm888, %v899, %v901
    %v903 = vshll.u32 %v863, 8
    %v904 = vand.u32 %v903, 65535
    %v905 = vshrl.u32 %v903, 16
    %v906 = vand.u32 %v902, 65535
    %v907 = vshrl.u32 %v902, 16
    %v908 = vmul.u32 %v904, %v906
    %v909 = vmul.u32 %v904, %v907
    %v910 = vmul.u32 %v905, %v906
    %v911 = vmul.u32 %v905, %v907
    %v912 = vshll.u32 %v909, 16
    %v913 = vshrl.u32 %v909, 16
    %v914 = vshll.u32 %v910, 16
    %v915 = vshrl.u32 %v910, 16
    %vm916 = vc.u32 %v908, %v912
    %v917 = vsel %vm916, 1, 0
    %v918 = vadd.s32 %v908, %v912
    %v919 = vadd.s32 %v911, %v917
    %vm920 = vc.u32 %v918, %v914
    %v921 = vsel %vm920, 1, 0
    %v922 = vadd.s32 %v918, %v914
    %v923 = vadd.s32 %v919, %v921
    %v924 = vadd.s32 %v923, %v913
    %v925 = vadd.s32 %v924, %v915
    %v926 = vand.u32 %v903, 65535
    %v927 = vshrl.u32 %v903, 16
    %v928 = vand.u32 %v898, 65535
    %v929 = vshrl.u32 %v898, 16
    %v930 = vmul.u32 %v926, %v928
    %v931 = vmul.u32 %v926, %v929
    %v932 = vmul.u32 %v927, %v928
    %v933 = vmul.u32 %v927, %v929
    %v934 = vshll.u32 %v931, 16
    %v935 = vshrl.u32 %v931, 16
    %v936 = vshll.u32 %v932, 16
    %v937 = vshrl.u32 %v932, 16
    %vm938 = vc.u32 %v930, %v934
    %v939 = vsel %vm938, 1, 0
    %v940 = vadd.s32 %v930, %v934
    %v941 = vadd.s32 %v933, %v939
    %vm942 = vc.u32 %v940, %v936
    %v943 = vsel %vm942, 1, 0
    %v944 = vadd.s32 %v940, %v936
    %v945 = vadd.s32 %v941, %v943
    %v946 = vadd.s32 %v945, %v935
    %v947 = vadd.s32 %v946, %v937
    %v948 = vmul.u32 %v903, %v894
    %v949 = vadd.s32 %v925, %v944
    %vm950 = vc.u32 %v925, %v944
    %v951 = vadd.s32 %v947, 1
    %v952 = vsel %vm950, %v951, %v947
    %v953 = vadd.s32 %v948, %v952
    %v954 = vadd.s32 %v953, 536870912
    %v955 = vshrl.u32 %v954, 30
    %v956 = vshll.u32 %v955, 30
    %v957 = vsub.s32 %v953, %v956
    %vm958 = vcmp.lt.s32.totalorder %v957, 0
    %v959 = vsub.s32 0, %v957
    %v960 = vsel %vm958, %v959, %v957
    %v961 = vclz %v960
    %v962 = vsub.s32 %v961, 2
    %vm963 = vcmp.gt.s32.totalorder 0, %v962
    %v964 = vsel %vm963, 0, %v962
    %v965 = vsub.s32 32, %v964
    %v966 = vshll.u32 %v957, %v964
    %v967 = vshrl.u32 %v949, %v965
    %v968 = vor.u32 %v966, %v967
    %v969 = vsub.s32 4294967266, %v964
    %v970 = vadd.s32 %v969, 127
    %v971 = vshll.u32 %v970, 23
    %v972 = vor.u32 4788187, %v971
    %v973 = vand.u32 2147483647, %v972
    %v975 = vcvt.s32.f32 %v968
    %v976 = vmul.f32 %v975, %v973
    %v977 = vxor.u32 %v976, 2147483648
    %v978 = vsel %vm857, %v977, %v976
    %v979 = vsub.s32 4, %v955
    %v980 = vsel %vm857, %v979, %v955
    %v981 = vsel %vm856, %v223, %v978
    %v982 = vsel %vm856, 0, %v980
    %v983 = vmul.f32 %v981, %v981
    %v984 = vmul.f32 %v983, -0.001358992
    %v985 = vadd.f32 %v984, 0.041655596
    %v986 = vmul.f32 %v983, %v985
    %v987 = vadd.f32 %v986, -0.4999988
    %v988 = vmul.f32 %v983, %v987
    %v989 = vadd.f32 1.0, %v988
    %v990 = vmul.f32 %v981, %v981
    %v991 = vmul.f32 %v990, -0.00019511016
    %v992 = vadd.f32 %v991, 0.008332121
    %v993 = vmul.f32 %v990, %v992
    %v994 = vadd.f32 %v993, -0.16666654
    %v995 = vmul.f32 %v990, %v994
    %v996 = vadd.f32 %v995, 1.0
    %v997 = vmul.f32 %v996, %v981
    %vm998 = vweird.f32 %v223
    %v999 = vadd.s32 %v982, 3
    %v1000 = vand.u32 %v999, 3
    %vm1001 = vcmp.lt.s32.totalorder %v1000, 2
    %vm1002 = vcmp.eq.s32.totalorder %v1000, 0
    %v1003 = vxor.u32 %v997, 2147483648
    %v1004 = vsel %vm1002, %v989, %v1003
    %vm1005 = vcmp.eq.s32.totalorder %v1000, 2
    %v1006 = vxor.u32 %v989, 2147483648
    %v1007 = vsel %vm1005, %v1006, %v997
    %v1008 = vsel %vm1001, %v1004, %v1007
    %v1009 = vsel %vm998, nan, %v1008
    %v1010 = vand.u32 2147483647, %v224
    %vm1011 = vcmp.le.f32.partialorder %v1010, 0.7853982
    %vm1012 = vcmp.lt.s32.totalorder %v224, 0
    %v1013 = vand.u32 %v224, 2139095040
    %v1014 = vshrl.u32 %v1013, 23
    %v1015 = vsub.s32 %v1014, 127
    %v1016 = vand.u32 2147483647, %v224
    %v1017 = vand.u32 %v1016, 8388607
    %v1018 = vor.u32 %v1017, 8388608
    %v1019 = vsub.s32 0, %v1018
    %v1020 = vadd.s32 %v1015, 1
    %vm1021 = vcmp.gt.s32.totalorder %v1020, 0
    %v1022 = vsel %vm1021, %v1020, 0
    %v1023 = vshrl.u32 %v1022, 5
    %v1024 = vand.u32 %v1022, 31
    %v1025 = vsub.s32 32, %v1024
    %v1026 = vshrl.u32 683565275, %v1025
    %v1027 = vshll.u32 683565275, %v1024
    %v1028 = vshrl.u32 2475754826, %v1025
    %v1029 = vor.u32 %v1027, %v1028
    %v1030 = vshll.u32 2475754826, %v1024
    %v1031 = vshrl.u32 2131351028, %v1025
    %v1032 = vor.u32 %v1030, %v1031
    %v1033 = vshll.u32 2131351028, %v1024
    %v1034 = vshrl.u32 2102212464, %v1025
    %v1035 = vor.u32 %v1033, %v1034
    %v1036 = vshll.u32 2102212464, %v1024
    %v1037 = vshrl.u32 920167782, %v1025
    %v1038 = vor.u32 %v1036, %v1037
    %v1039 = vshll.u32 920167782, %v1024
    %v1040 = vshrl.u32 1326507024, %v1025
    %v1041 = vor.u32 %v1039, %v1040
    %vm1042 = vcmp.lt.s32.totalorder %v1023, 1
    %vm1043 = vcmp.lt.s32.totalorder %v1023, 2
    %vm1044 = vcmp.lt.s32.totalorder %v1023, 3
    %vm1045 = vcmp.lt.s32.totalorder %v1023, 4
    %v1046 = vsel %vm1042, %v1026, %v1029
    %v1047 = vsel %vm1045, %v1035, 2102212464
    %v1048 = vsel %vm1044, %v1032, %v1047
    %v1049 = vsel %vm1043, %v1046, %v1048
    %v1050 = vsel %vm1042, %v1029, %v1032
    %v1051 = vsel %vm1045, %v1038, 920167782
    %v1052 = vsel %vm1044, %v1035, %v1051
    %v1053 = vsel %vm1043, %v1050, %v1052
    %v1054 = vsel %vm1042, %v1032, %v1035
    %v1055 = vsel %vm1045, %v1041, 1326507024
    %v1056 = vsel %vm1044, %v1038, %v1055
    %v1057 = vsel %vm1043, %v1054, %v1056
    %v1058 = vshll.u32 %v1018, 8
    %v1059 = vand.u32 %v1058, 65535
    %v1060 = vshrl.u32 %v1058, 16
    %v1061 = vand.u32 %v1057, 65535
    %v1062 = vshrl.u32 %v1057, 16
    %v1063 = vmul.u32 %v1059, %v1061
    %v1064 = vmul.u32 %v1059, %v1062
    %v1065 = vmul.u32 %v1060, %v1061
    %v1066 = vmul.u32 %v1060, %v1062
    %v1067 = vshll.u32 %v1064, 16
    %v1068 = vshrl.u32 %v1064, 16
    %v1069 = vshll.u32 %v1065, 16
    %v1070 = vshrl.u32 %v1065, 16
    %vm1071 = vc.u32 %v1063, %v1067
    %v1072 = vsel %vm1071, 1, 0
    %v1073 = vadd.s32 %v1063, %v1067
    %v1074 = vadd.s32 %v1066, %v1072
    %vm1075 = vc.u32 %v1073, %v1069
    %v1076 = vsel %vm1075, 1, 0
    %v1077 = vadd.s32 %v1073, %v1069
    %v1078 = vadd.s32 %v1074, %v1076
    %v1079 = vadd.s32 %v1078, %v1068
    %v1080 = vadd.s32 %v1079, %v1070
    %v1081 = vand.u32 %v1058, 65535
    %v1082 = vshrl.u32 %v1058, 16
    %v1083 = vand.u32 %v1053, 65535
    %v1084 = vshrl.u32 %v1053, 16
    %v1085 = vmul.u32 %v1081, %v1083
    %v1086 = vmul.u32 %v1081, %v1084
    %v1087 = vmul.u32 %v1082, %v1083
    %v1088 = vmul.u32 %v1082, %v1084
    %v1089 = vshll.u32 %v1086, 16
    %v1090 = vshrl.u32 %v1086, 16
    %v1091 = vshll.u32 %v1087, 16
    %v1092 = vshrl.u32 %v1087, 16
    %vm1093 = vc.u32 %v1085, %v1089
    %v1094 = vsel %vm1093, 1, 0
    %v1095 = vadd.s32 %v1085, %v1089
    %v1096 = vadd.s32 %v1088, %v1094
    %vm1097 = vc.u32 %v1095, %v1091
    %v1098 = vsel %vm1097, 1, 0
    %v1099 = vadd.s32 %v1095, %v1091
    %v1100 = vadd.s32 %v1096, %v1098
    %v1101 = vadd.s32 %v1100, %v1090
    %v1102 = vadd.s32 %v1101, %v1092
    %v1103 = vmul.u32 %v1058, %v1049
    %v1104 = vadd.s32 %v1080, %v1099
    %vm1105 = vc.u32 %v1080, %v1099
    %v1106 = vadd.s32 %v1102, 1
    %v1107 = vsel %vm1105, %v1106, %v1102
    %v1108 = vadd.s32 %v1103, %v1107
    %v1109 = vadd.s32 %v1108, 536870912
    %v1110 = vshrl.u32 %v1109, 30
    %v1111 = vshll.u32 %v1110, 30
    %v1112 = vsub.s32 %v1108, %v1111
    %vm1113 = vcmp.lt.s32.totalorder %v1112, 0
    %v1114 = vsub.s32 0, %v1112
    %v1115 = vsel %vm1113, %v1114, %v1112
    %v1116 = vclz %v1115
    %v1117 = vsub.s32 %v1116, 2
    %vm1118 = vcmp.gt.s32.totalorder 0, %v1117
    %v1119 = vsel %vm1118, 0, %v1117
    %v1120 = vsub.s32 32, %v1119
    %v1121 = vshll.u32 %v1112, %v1119
    %v1122 = vshrl.u32 %v1104, %v1120
    %v1123 = vor.u32 %v1121, %v1122
    %v1124 = vsub.s32 4294967266, %v1119
    %v1125 = vadd.s32 %v1124, 127
    %v1126 = vshll.u32 %v1125, 23
    %v1127 = vor.u32 4788187, %v1126
    %v1128 = vand.u32 2147483647, %v1127
    %v1130 = vcvt.s32.f32 %v1123
    %v1131 = vmul.f32 %v1130, %v1128
    %v1132 = vxor.u32 %v1131, 2147483648
    %v1133 = vsel %vm1012, %v1132, %v1131
    %v1134 = vsub.s32 4, %v1110
    %v1135 = vsel %vm1012, %v1134, %v1110
    %v1136 = vsel %vm1011, %v224, %v1133
    %v1137 = vsel %vm1011, 0, %v1135
    %v1138 = vmul.f32 %v1136, %v1136
    %v1139 = vmul.f32 %v1138, -0.001358992
    %v1140 = vadd.f32 %v1139, 0.041655596
    %v1141 = vmul.f32 %v1138, %v1140
    %v1142 = vadd.f32 %v1141, -0.4999988
    %v1143 = vmul.f32 %v1138, %v1142
    %v1144 = vadd.f32 1.0, %v1143
    %v1145 = vmul.f32 %v1136, %v1136
    %v1146 = vmul.f32 %v1145, -0.00019511016
    %v1147 = vadd.f32 %v1146, 0.008332121
    %v1148 = vmul.f32 %v1145, %v1147
    %v1149 = vadd.f32 %v1148, -0.16666654
    %v1150 = vmul.f32 %v1145, %v1149
    %v1151 = vadd.f32 %v1150, 1.0
    %v1152 = vmul.f32 %v1151, %v1136
    %vm1153 = vweird.f32 %v224
    %v1154 = vadd.s32 %v1137, 3
    %v1155 = vand.u32 %v1154, 3
    %vm1156 = vcmp.lt.s32.totalorder %v1155, 2
    %vm1157 = vcmp.eq.s32.totalorder %v1155, 0
    %v1158 = vxor.u32 %v1152, 2147483648
    %v1159 = vsel %vm1157, %v1144, %v1158
    %vm1160 = vcmp.eq.s32.totalorder %v1155, 2
    %v1161 = vxor.u32 %v1144, 2147483648
    %v1162 = vsel %vm1160, %v1161, %v1152
    %v1163 = vsel %vm1156, %v1159, %v1162
    %v1164 = vsel %vm1153, nan, %v1163
    %v1165 = vand.u32 2147483647, %v225
    %vm1166 = vcmp.le.f32.partialorder %v1165, 0.7853982
    %vm1167 = vcmp.lt.s32.totalorder %v225, 0
    %v1168 = vand.u32 %v225, 2139095040
    %v1169 = vshrl.u32 %v1168, 23
    %v1170 = vsub.s32 %v1169, 127
    %v1171 = vand.u32 2147483647, %v225
    %v1172 = vand.u32 %v1171, 8388607
    %v1173 = vor.u32 %v1172, 8388608
    %v1174 = vsub.s32 0, %v1173
    %v1175 = vadd.s32 %v1170, 1
    %vm1176 = vcmp.gt.s32.totalorder %v1175, 0
    %v1177 = vsel %vm1176, %v1175, 0
    %v1178 = vshrl.u32 %v1177, 5
    %v1179 = vand.u32 %v1177, 31
    %v1180 = vsub.s32 32, %v1179
    %v1181 = vshrl.u32 683565275, %v1180
    %v1182 = vshll.u32 683565275, %v1179
    %v1183 = vshrl.u32 2475754826, %v1180
    %v1184 = vor.u32 %v1182, %v1183
    %v1185 = vshll.u32 2475754826, %v1179
    %v1186 = vshrl.u32 2131351028, %v1180
    %v1187 = vor.u32 %v1185, %v1186
    %v1188 = vshll.u32 2131351028, %v1179
    %v1189 = vshrl.u32 2102212464, %v1180
    %v1190 = vor.u32 %v1188, %v1189
    %v1191 = vshll.u32 2102212464, %v1179
    %v1192 = vshrl.u32 920167782, %v1180
    %v1193 = vor.u32 %v1191, %v1192
    %v1194 = vshll.u32 920167782, %v1179
    %v1195 = vshrl.u32 1326507024, %v1180
    %v1196 = vor.u32 %v1194, %v1195
    %vm1197 = vcmp.lt.s32.totalorder %v1178, 1
    %vm1198 = vcmp.lt.s32.totalorder %v1178, 2
    %vm1199 = vcmp.lt.s32.totalorder %v1178, 3
    %vm1200 = vcmp.lt.s32.totalorder %v1178, 4
    %v1201 = vsel %vm1197, %v1181, %v1184
    %v1202 = vsel %vm1200, %v1190, 2102212464
    %v1203 = vsel %vm1199, %v1187, %v1202
    %v1204 = vsel %vm1198, %v1201, %v1203
    %v1205 = vsel %vm1197, %v1184, %v1187
    %v1206 = vsel %vm1200, %v1193, 920167782
    %v1207 = vsel %vm1199, %v1190, %v1206
    %v1208 = vsel %vm1198, %v1205, %v1207
    %v1209 = vsel %vm1197, %v1187, %v1190
    %v1210 = vsel %vm1200, %v1196, 1326507024
    %v1211 = vsel %vm1199, %v1193, %v1210
    %v1212 = vsel %vm1198, %v1209, %v1211
    %v1213 = vshll.u32 %v1173, 8
    %v1214 = vand.u32 %v1213, 65535
    %v1215 = vshrl.u32 %v1213, 16
    %v1216 = vand.u32 %v1212, 65535
    %v1217 = vshrl.u32 %v1212, 16
    %v1218 = vmul.u32 %v1214, %v1216
    %v1219 = vmul.u32 %v1214, %v1217
    %v1220 = vmul.u32 %v1215, %v1216
    %v1221 = vmul.u32 %v1215, %v1217
    %v1222 = vshll.u32 %v1219, 16
    %v1223 = vshrl.u32 %v1219, 16
    %v1224 = vshll.u32 %v1220, 16
    %v1225 = vshrl.u32 %v1220, 16
    %vm1226 = vc.u32 %v1218, %v1222
    %v1227 = vsel %vm1226, 1, 0
    %v1228 = vadd.s32 %v1218, %v1222
    %v1229 = vadd.s32 %v1221, %v1227
    %vm1230 = vc.u32 %v1228, %v1224
    %v1231 = vsel %vm1230, 1, 0
    %v1232 = vadd.s32 %v1228, %v1224
    %v1233 = vadd.s32 %v1229, %v1231
    %v1234 = vadd.s32 %v1233, %v1223
    %v1235 = vadd.s32 %v1234, %v1225
    %v1236 = vand.u32 %v1213, 65535
    %v1237 = vshrl.u32 %v1213, 16
    %v1238 = vand.u32 %v1208, 65535
    %v1239 = vshrl.u32 %v1208, 16
    %v1240 = vmul.u32 %v1236, %v1238
    %v1241 = vmul.u32 %v1236, %v1239
    %v1242 = vmul.u32 %v1237, %v1238
    %v1243 = vmul.u32 %v1237, %v1239
    %v1244 = vshll.u32 %v1241, 16
    %v1245 = vshrl.u32 %v1241, 16
    %v1246 = vshll.u32 %v1242, 16
    %v1247 = vshrl.u32 %v1242, 16
    %vm1248 = vc.u32 %v1240, %v1244
    %v1249 = vsel %vm1248, 1, 0
    %v1250 = vadd.s32 %v1240, %v1244
    %v1251 = vadd.s32 %v1243, %v1249
    %vm1252 = vc.u32 %v1250, %v1246
    %v1253 = vsel %vm1252, 1, 0
    %v1254 = vadd.s32 %v1250, %v1246
    %v1255 = vadd.s32 %v1251, %v1253
    %v1256 = vadd.s32 %v1255, %v1245
    %v1257 = vadd.s32 %v1256, %v1247
    %v1258 = vmul.u32 %v1213, %v1204
    %v1259 = vadd.s32 %v1235, %v1254
    %vm1260 = vc.u32 %v1235, %v1254
    %v1261 = vadd.s32 %v1257, 1
    %v1262 = vsel %vm1260, %v1261, %v1257
    %v1263 = vadd.s32 %v1258, %v1262
    %v1264 = vadd.s32 %v1263, 536870912
    %v1265 = vshrl.u32 %v1264, 30
    %v1266 = vshll.u32 %v1265, 30
    %v1267 = vsub.s32 %v1263, %v1266
    %vm1268 = vcmp.lt.s32.totalorder %v1267, 0
    %v1269 = vsub.s32 0, %v1267
    %v1270 = vsel %vm1268, %v1269, %v1267
    %v1271 = vclz %v1270
    %v1272 = vsub.s32 %v1271, 2
    %vm1273 = vcmp.gt.s32.totalorder 0, %v1272
    %v1274 = vsel %vm1273, 0, %v1272
    %v1275 = vsub.s32 32, %v1274
    %v1276 = vshll.u32 %v1267, %v1274
    %v1277 = vshrl.u32 %v1259, %v1275
    %v1278 = vor.u32 %v1276, %v1277
    %v1279 = vsub.s32 4294967266, %v1274
    %v1280 = vadd.s32 %v1279, 127
    %v1281 = vshll.u32 %v1280, 23
    %v1282 = vor.u32 4788187, %v1281
    %v1283 = vand.u32 2147483647, %v1282
    %v1285 = vcvt.s32.f32 %v1278
    %v1286 = vmul.f32 %v1285, %v1283
    %v1287 = vxor.u32 %v1286, 2147483648
    %v1288 = vsel %vm1167, %v1287, %v1286
    %v1289 = vsub.s32 4, %v1265
    %v1290 = vsel %vm1167, %v1289, %v1265
    %v1291 = vsel %vm1166, %v225, %v1288
    %v1292 = vsel %vm1166, 0, %v1290
    %v1293 = vmul.f32 %v1291, %v1291
    %v1294 = vmul.f32 %v1293, -0.001358992
    %v1295 = vadd.f32 %v1294, 0.041655596
    %v1296 = vmul.f32 %v1293, %v1295
    %v1297 = vadd.f32 %v1296, -0.4999988
    %v1298 = vmul.f32 %v1293, %v1297
    %v1299 = vadd.f32 1.0, %v1298
    %v1300 = vmul.f32 %v1291, %v1291
    %v1301 = vmul.f32 %v1300, -0.00019511016
    %v1302 = vadd.f32 %v1301, 0.008332121
    %v1303 = vmul.f32 %v1300, %v1302
    %v1304 = vadd.f32 %v1303, -0.16666654
    %v1305 = vmul.f32 %v1300, %v1304
    %v1306 = vadd.f32 %v1305, 1.0
    %v1307 = vmul.f32 %v1306, %v1291
    %vm1308 = vweird.f32 %v225
    %v1309 = vadd.s32 %v1292, 3
    %v1310 = vand.u32 %v1309, 3
    %vm1311 = vcmp.lt.s32.totalorder %v1310, 2
    %vm1312 = vcmp.eq.s32.totalorder %v1310, 0
    %v1313 = vxor.u32 %v1307, 2147483648
    %v1314 = vsel %vm1312, %v1299, %v1313
    %vm1315 = vcmp.eq.s32.totalorder %v1310, 2
    %v1316 = vxor.u32 %v1299, 2147483648
    %v1317 = vsel %vm1315, %v1316, %v1307
    %v1318 = vsel %vm1311, %v1314, %v1317
    %v1319 = vsel %vm1308, nan, %v1318
    %v1320 = vand.u32 2147483647, %v226
    %vm1321 = vcmp.le.f32.partialorder %v1320, 0.7853982
    %vm1322 = vcmp.lt.s32.totalorder %v226, 0
    %v1323 = vand.u32 %v226, 2139095040
    %v1324 = vshrl.u32 %v1323, 23
    %v1325 = vsub.s32 %v1324, 127
    %v1326 = vand.u32 2147483647, %v226
    %v1327 = vand.u32 %v1326, 8388607
    %v1328 = vor.u32 %v1327, 8388608
    %v1329 = vsub.s32 0, %v1328
    %v1330 = vadd.s32 %v1325, 1
    %vm1331 = vcmp.gt.s32.totalorder %v1330, 0
    %v1332 = vsel %vm1331, %v1330, 0
    %v1333 = vshrl.u32 %v1332, 5
    %v1334 = vand.u32 %v1332, 31
    %v1335 = vsub.s32 32, %v1334
    %v1336 = vshrl.u32 683565275, %v1335
    %v1337 = vshll.u32 683565275, %v1334
    %v1338 = vshrl.u32 2475754826, %v1335
    %v1339 = vor.u32 %v1337, %v1338
    %v1340 = vshll.u32 2475754826, %v1334
    %v1341 = vshrl.u32 2131351028, %v1335
    %v1342 = vor.u32 %v1340, %v1341
    %v1343 = vshll.u32 2131351028, %v1334
    %v1344 = vshrl.u32 2102212464, %v1335
    %v1345 = vor.u32 %v1343, %v1344
    %v1346 = vshll.u32 2102212464, %v1334
    %v1347 = vshrl.u32 920167782, %v1335
    %v1348 = vor.u32 %v1346, %v1347
    %v1349 = vshll.u32 920167782, %v1334
    %v1350 = vshrl.u32 1326507024, %v1335
    %v1351 = vor.u32 %v1349, %v1350
    %vm1352 = vcmp.lt.s32.totalorder %v1333, 1
    %vm1353 = vcmp.lt.s32.totalorder %v1333, 2
    %vm1354 = vcmp.lt.s32.totalorder %v1333, 3
    %vm1355 = vcmp.lt.s32.totalorder %v1333, 4
    %v1356 = vsel %vm1352, %v1336, %v1339
    %v1357 = vsel %vm1355, %v1345, 2102212464
    %v1358 = vsel %vm1354, %v1342, %v1357
    %v1359 = vsel %vm1353, %v1356, %v1358
    %v1360 = vsel %vm1352, %v1339, %v1342
    %v1361 = vsel %vm1355, %v1348, 920167782
    %v1362 = vsel %vm1354, %v1345, %v1361
    %v1363 = vsel %vm1353, %v1360, %v1362
    %v1364 = vsel %vm1352, %v1342, %v1345
    %v1365 = vsel %vm1355, %v1351, 1326507024
    %v1366 = vsel %vm1354, %v1348, %v1365
    %v1367 = vsel %vm1353, %v1364, %v1366
    %v1368 = vshll.u32 %v1328, 8
    %v1369 = vand.u32 %v1368, 65535
    %v1370 = vshrl.u32 %v1368, 16
    %v1371 = vand.u32 %v1367, 65535
    %v1372 = vshrl.u32 %v1367, 16
    %v1373 = vmul.u32 %v1369, %v1371
    %v1374 = vmul.u32 %v1369, %v1372
    %v1375 = vmul.u32 %v1370, %v1371
    %v1376 = vmul.u32 %v1370, %v1372
    %v1377 = vshll.u32 %v1374, 16
    %v1378 = vshrl.u32 %v1374, 16
    %v1379 = vshll.u32 %v1375, 16
    %v1380 = vshrl.u32 %v1375, 16
    %vm1381 = vc.u32 %v1373, %v1377
    %v1382 = vsel %vm1381, 1, 0
    %v1383 = vadd.s32 %v1373, %v1377
    %v1384 = vadd.s32 %v1376, %v1382
    %vm1385 = vc.u32 %v1383, %v1379
    %v1386 = vsel %vm1385, 1, 0
    %v1387 = vadd.s32 %v1383, %v1379
    %v1388 = vadd.s32 %v1384, %v1386
    %v1389 = vadd.s32 %v1388, %v1378
    %v1390 = vadd.s32 %v1389, %v1380
    %v1391 = vand.u32 %v1368, 65535
    %v1392 = vshrl.u32 %v1368, 16
    %v1393 = vand.u32 %v1363, 65535
    %v1394 = vshrl.u32 %v1363, 16
    %v1395 = vmul.u32 %v1391, %v1393
    %v1396 = vmul.u32 %v1391, %v1394
    %v1397 = vmul.u32 %v1392, %v1393
    %v1398 = vmul.u32 %v1392, %v1394
    %v1399 = vshll.u32 %v1396, 16
    %v1400 = vshrl.u32 %v1396, 16
    %v1401 = vshll.u32 %v1397, 16
    %v1402 = vshrl.u32 %v1397, 16
    %vm1403 = vc.u32 %v1395, %v1399
    %v1404 = vsel %vm1403, 1, 0
    %v1405 = vadd.s32 %v1395, %v1399
    %v1406 = vadd.s32 %v1398, %v1404
    %vm1407 = vc.u32 %v1405, %v1401
    %v1408 = vsel %vm1407, 1, 0
    %v1409 = vadd.s32 %v1405, %v1401
    %v1410 = vadd.s32 %v1406, %v1408
    %v1411 = vadd.s32 %v1410, %v1400
    %v1412 = vadd.s32 %v1411, %v1402
    %v1413 = vmul.u32 %v1368, %v1359
    %v1414 = vadd.s32 %v1390, %v1409
    %vm1415 = vc.u32 %v1390, %v1409
    %v1416 = vadd.s32 %v1412, 1
    %v1417 = vsel %vm1415, %v1416, %v1412
    %v1418 = vadd.s32 %v1413, %v1417
    %v1419 = vadd.s32 %v1418, 536870912
    %v1420 = vshrl.u32 %v1419, 30
    %v1421 = vshll.u32 %v1420, 30
    %v1422 = vsub.s32 %v1418, %v1421
    %vm1423 = vcmp.lt.s32.totalorder %v1422, 0
    %v1424 = vsub.s32 0, %v1422
    %v1425 = vsel %vm1423, %v1424, %v1422
    %v1426 = vclz %v1425
    %v1427 = vsub.s32 %v1426, 2
    %vm1428 = vcmp.gt.s32.totalorder 0, %v1427
    %v1429 = vsel %vm1428, 0, %v1427
    %v1430 = vsub.s32 32, %v1429
    %v1431 = vshll.u32 %v1422, %v1429
    %v1432 = vshrl.u32 %v1414, %v1430
    %v1433 = vor.u32 %v1431, %v1432
    %v1434 = vsub.s32 4294967266, %v1429
    %v1435 = vadd.s32 %v1434, 127
    %v1436 = vshll.u32 %v1435, 23
    %v1437 = vor.u32 4788187, %v1436
    %v1438 = vand.u32 2147483647, %v1437
    %v1440 = vcvt.s32.f32 %v1433
    %v1441 = vmul.f32 %v1440, %v1438
    %v1442 = vxor.u32 %v1441, 2147483648
    %v1443 = vsel %vm1322, %v1442, %v1441
    %v1444 = vsub.s32 4, %v1420
    %v1445 = vsel %vm1322, %v1444, %v1420
    %v1446 = vsel %vm1321, %v226, %v1443
    %v1447 = vsel %vm1321, 0, %v1445
    %v1448 = vmul.f32 %v1446, %v1446
    %v1449 = vmul.f32 %v1448, -0.001358992
    %v1450 = vadd.f32 %v1449, 0.041655596
    %v1451 = vmul.f32 %v1448, %v1450
    %v1452 = vadd.f32 %v1451, -0.4999988
    %v1453 = vmul.f32 %v1448, %v1452
    %v1454 = vadd.f32 1.0, %v1453
    %v1455 = vmul.f32 %v1446, %v1446
    %v1456 = vmul.f32 %v1455, -0.00019511016
    %v1457 = vadd.f32 %v1456, 0.008332121
    %v1458 = vmul.f32 %v1455, %v1457
    %v1459 = vadd.f32 %v1458, -0.16666654
    %v1460 = vmul.f32 %v1455, %v1459
    %v1461 = vadd.f32 %v1460, 1.0
    %v1462 = vmul.f32 %v1461, %v1446
    %vm1463 = vweird.f32 %v226
    %v1464 = vadd.s32 %v1447, 3
    %v1465 = vand.u32 %v1464, 3
    %vm1466 = vcmp.lt.s32.totalorder %v1465, 2
    %vm1467 = vcmp.eq.s32.totalorder %v1465, 0
    %v1468 = vxor.u32 %v1462, 2147483648
    %v1469 = vsel %vm1467, %v1454, %v1468
    %vm1470 = vcmp.eq.s32.totalorder %v1465, 2
    %v1471 = vxor.u32 %v1454, 2147483648
    %v1472 = vsel %vm1470, %v1471, %v1462
    %v1473 = vsel %vm1466, %v1469, %v1472
    %v1474 = vsel %vm1463, nan, %v1473
    %v1475 = vand.u32 2147483647, %v227
    %vm1476 = vcmp.le.f32.partialorder %v1475, 0.7853982
    %vm1477 = vcmp.lt.s32.totalorder %v227, 0
    %v1478 = vand.u32 %v227, 2139095040
    %v1479 = vshrl.u32 %v1478, 23
    %v1480 = vsub.s32 %v1479, 127
    %v1481 = vand.u32 2147483647, %v227
    %v1482 = vand.u32 %v1481, 8388607
    %v1483 = vor.u32 %v1482, 8388608
    %v1484 = vsub.s32 0, %v1483
    %v1485 = vadd.s32 %v1480, 1
    %vm1486 = vcmp.gt.s32.totalorder %v1485, 0
    %v1487 = vsel %vm1486, %v1485, 0
    %v1488 = vshrl.u32 %v1487, 5
    %v1489 = vand.u32 %v1487, 31
    %v1490 = vsub.s32 32, %v1489
    %v1491 = vshrl.u32 683565275, %v1490
    %v1492 = vshll.u32 683565275, %v1489
    %v1493 = vshrl.u32 2475754826, %v1490
    %v1494 = vor.u32 %v1492, %v1493
    %v1495 = vshll.u32 2475754826, %v1489
    %v1496 = vshrl.u32 2131351028, %v1490
    %v1497 = vor.u32 %v1495, %v1496
    %v1498 = vshll.u32 2131351028, %v1489
    %v1499 = vshrl.u32 2102212464, %v1490
    %v1500 = vor.u32 %v1498, %v1499
    %v1501 = vshll.u32 2102212464, %v1489
    %v1502 = vshrl.u32 920167782, %v1490
    %v1503 = vor.u32 %v1501, %v1502
    %v1504 = vshll.u32 920167782, %v1489
    %v1505 = vshrl.u32 1326507024, %v1490
    %v1506 = vor.u32 %v1504, %v1505
    %vm1507 = vcmp.lt.s32.totalorder %v1488, 1
    %vm1508 = vcmp.lt.s32.totalorder %v1488, 2
    %vm1509 = vcmp.lt.s32.totalorder %v1488, 3
    %vm1510 = vcmp.lt.s32.totalorder %v1488, 4
    %v1511 = vsel %vm1507, %v1491, %v1494
    %v1512 = vsel %vm1510, %v1500, 2102212464
    %v1513 = vsel %vm1509, %v1497, %v1512
    %v1514 = vsel %vm1508, %v1511, %v1513
    %v1515 = vsel %vm1507, %v1494, %v1497
    %v1516 = vsel %vm1510, %v1503, 920167782
    %v1517 = vsel %vm1509, %v1500, %v1516
    %v1518 = vsel %vm1508, %v1515, %v1517
    %v1519 = vsel %vm1507, %v1497, %v1500
    %v1520 = vsel %vm1510, %v1506, 1326507024
    %v1521 = vsel %vm1509, %v1503, %v1520
    %v1522 = vsel %vm1508, %v1519, %v1521
    %v1523 = vshll.u32 %v1483, 8
    %v1524 = vand.u32 %v1523, 65535
    %v1525 = vshrl.u32 %v1523, 16
    %v1526 = vand.u32 %v1522, 65535
    %v1527 = vshrl.u32 %v1522, 16
    %v1528 = vmul.u32 %v1524, %v1526
    %v1529 = vmul.u32 %v1524, %v1527
    %v1530 = vmul.u32 %v1525, %v1526
    %v1531 = vmul.u32 %v1525, %v1527
    %v1532 = vshll.u32 %v1529, 16
    %v1533 = vshrl.u32 %v1529, 16
    %v1534 = vshll.u32 %v1530, 16
    %v1535 = vshrl.u32 %v1530, 16
    %vm1536 = vc.u32 %v1528, %v1532
    %v1537 = vsel %vm1536, 1, 0
    %v1538 = vadd.s32 %v1528, %v1532
    %v1539 = vadd.s32 %v1531, %v1537
    %vm1540 = vc.u32 %v1538, %v1534
    %v1541 = vsel %vm1540, 1, 0
    %v1542 = vadd.s32 %v1538, %v1534
    %v1543 = vadd.s32 %v1539, %v1541
    %v1544 = vadd.s32 %v1543, %v1533
    %v1545 = vadd.s32 %v1544, %v1535
    %v1546 = vand.u32 %v1523, 65535
    %v1547 = vshrl.u32 %v1523, 16
    %v1548 = vand.u32 %v1518, 65535
    %v1549 = vshrl.u32 %v1518, 16
    %v1550 = vmul.u32 %v1546, %v1548
    %v1551 = vmul.u32 %v1546, %v1549
    %v1552 = vmul.u32 %v1547, %v1548
    %v1553 = vmul.u32 %v1547, %v1549
    %v1554 = vshll.u32 %v1551, 16
    %v1555 = vshrl.u32 %v1551, 16
    %v1556 = vshll.u32 %v1552, 16
    %v1557 = vshrl.u32 %v1552, 16
    %vm1558 = vc.u32 %v1550, %v1554
    %v1559 = vsel %vm1558, 1, 0
    %v1560 = vadd.s32 %v1550, %v1554
    %v1561 = vadd.s32 %v1553, %v1559
    %vm1562 = vc.u32 %v1560, %v1556
    %v1563 = vsel %vm1562, 1, 0
    %v1564 = vadd.s32 %v1560, %v1556
    %v1565 = vadd.s32 %v1561, %v1563
    %v1566 = vadd.s32 %v1565, %v1555
    %v1567 = vadd.s32 %v1566, %v1557
    %v1568 = vmul.u32 %v1523, %v1514
    %v1569 = vadd.s32 %v1545, %v1564
    %vm1570 = vc.u32 %v1545, %v1564
    %v1571 = vadd.s32 %v1567, 1
    %v1572 = vsel %vm1570, %v1571, %v1567
    %v1573 = vadd.s32 %v1568, %v1572
    %v1574 = vadd.s32 %v1573, 536870912
    %v1575 = vshrl.u32 %v1574, 30
    %v1576 = vshll.u32 %v1575, 30
    %v1577 = vsub.s32 %v1573, %v1576
    %vm1578 = vcmp.lt.s32.totalorder %v1577, 0
    %v1579 = vsub.s32 0, %v1577
    %v1580 = vsel %vm1578, %v1579, %v1577
    %v1581 = vclz %v1580
    %v1582 = vsub.s32 %v1581, 2
    %vm1583 = vcmp.gt.s32.totalorder 0, %v1582
    %v1584 = vsel %vm1583, 0, %v1582
    %v1585 = vsub.s32 32, %v1584
    %v1586 = vshll.u32 %v1577, %v1584
    %v1587 = vshrl.u32 %v1569, %v1585
    %v1588 = vor.u32 %v1586, %v1587
    %v1589 = vsub.s32 4294967266, %v1584
    %v1590 = vadd.s32 %v1589, 127
    %v1591 = vshll.u32 %v1590, 23
    %v1592 = vor.u32 4788187, %v1591
    %v1593 = vand.u32 2147483647, %v1592
    %v1595 = vcvt.s32.f32 %v1588
    %v1596 = vmul.f32 %v1595, %v1593
    %v1597 = vxor.u32 %v1596, 2147483648
    %v1598 = vsel %vm1477, %v1597, %v1596
    %v1599 = vsub.s32 4, %v1575
    %v1600 = vsel %vm1477, %v1599, %v1575
    %v1601 = vsel %vm1476, %v227, %v1598
    %v1602 = vsel %vm1476, 0, %v1600
    %v1603 = vmul.f32 %v1601, %v1601
    %v1604 = vmul.f32 %v1603, -0.001358992
    %v1605 = vadd.f32 %v1604, 0.041655596
    %v1606 = vmul.f32 %v1603, %v1605
    %v1607 = vadd.f32 %v1606, -0.4999988
    %v1608 = vmul.f32 %v1603, %v1607
    %v1609 = vadd.f32 1.0, %v1608
    %v1610 = vmul.f32 %v1601, %v1601
    %v1611 = vmul.f32 %v1610, -0.00019511016
    %v1612 = vadd.f32 %v1611, 0.008332121
    %v1613 = vmul.f32 %v1610, %v1612
    %v1614 = vadd.f32 %v1613, -0.16666654
    %v1615 = vmul.f32 %v1610, %v1614
    %v1616 = vadd.f32 %v1615, 1.0
    %v1617 = vmul.f32 %v1616, %v1601
    %vm1618 = vweird.f32 %v227
    %v1619 = vadd.s32 %v1602, 3
    %v1620 = vand.u32 %v1619, 3
    %vm1621 = vcmp.lt.s32.totalorder %v1620, 2
    %vm1622 = vcmp.eq.s32.totalorder %v1620, 0
    %v1623 = vxor.u32 %v1617, 2147483648
    %v1624 = vsel %vm1622, %v1609, %v1623
    %vm1625 = vcmp.eq.s32.totalorder %v1620, 2
    %v1626 = vxor.u32 %v1609, 2147483648
    %v1627 = vsel %vm1625, %v1626, %v1617
    %v1628 = vsel %vm1621, %v1624, %v1627
    %v1629 = vsel %vm1618, nan, %v1628
    %v1630 = vand.u32 2147483647, %v228
    %vm1631 = vcmp.le.f32.partialorder %v1630, 0.7853982
    %vm1632 = vcmp.lt.s32.totalorder %v228, 0
    %v1633 = vand.u32 %v228, 2139095040
    %v1634 = vshrl.u32 %v1633, 23
    %v1635 = vsub.s32 %v1634, 127
    %v1636 = vand.u32 2147483647, %v228
    %v1637 = vand.u32 %v1636, 8388607
    %v1638 = vor.u32 %v1637, 8388608
    %v1639 = vsub.s32 0, %v1638
    %v1640 = vadd.s32 %v1635, 1
    %vm1641 = vcmp.gt.s32.totalorder %v1640, 0
    %v1642 = vsel %vm1641, %v1640, 0
    %v1643 = vshrl.u32 %v1642, 5
    %v1644 = vand.u32 %v1642, 31
    %v1645 = vsub.s32 32, %v1644
    %v1646 = vshrl.u32 683565275, %v1645
    %v1647 = vshll.u32 683565275, %v1644
    %v1648 = vshrl.u32 2475754826, %v1645
    %v1649 = vor.u32 %v1647, %v1648
    %v1650 = vshll.u32 2475754826, %v1644
    %v1651 = vshrl.u32 2131351028, %v1645
    %v1652 = vor.u32 %v1650, %v1651
    %v1653 = vshll.u32 2131351028, %v1644
    %v1654 = vshrl.u32 2102212464, %v1645
    %v1655 = vor.u32 %v1653, %v1654
    %v1656 = vshll.u32 2102212464, %v1644
    %v1657 = vshrl.u32 920167782, %v1645
    %v1658 = vor.u32 %v1656, %v1657
    %v1659 = vshll.u32 920167782, %v1644
    %v1660 = vshrl.u32 1326507024, %v1645
    %v1661 = vor.u32 %v1659, %v1660
    %vm1662 = vcmp.lt.s32.totalorder %v1643, 1
    %vm1663 = vcmp.lt.s32.totalorder %v1643, 2
    %vm1664 = vcmp.lt.s32.totalorder %v1643, 3
    %vm1665 = vcmp.lt.s32.totalorder %v1643, 4
    %v1666 = vsel %vm1662, %v1646, %v1649
    %v1667 = vsel %vm1665, %v1655, 2102212464
    %v1668 = vsel %vm1664, %v1652, %v1667
    %v1669 = vsel %vm1663, %v1666, %v1668
    %v1670 = vsel %vm1662, %v1649, %v1652
    %v1671 = vsel %vm1665, %v1658, 920167782
    %v1672 = vsel %vm1664, %v1655, %v1671
    %v1673 = vsel %vm1663, %v1670, %v1672
    %v1674 = vsel %vm1662, %v1652, %v1655
    %v1675 = vsel %vm1665, %v1661, 1326507024
    %v1676 = vsel %vm1664, %v1658, %v1675
    %v1677 = vsel %vm1663, %v1674, %v1676
    %v1678 = vshll.u32 %v1638, 8
    %v1679 = vand.u32 %v1678, 65535
    %v1680 = vshrl.u32 %v1678, 16
    %v1681 = vand.u32 %v1677, 65535
    %v1682 = vshrl.u32 %v1677, 16
    %v1683 = vmul.u32 %v1679, %v1681
    %v1684 = vmul.u32 %v1679, %v1682
    %v1685 = vmul.u32 %v1680, %v1681
    %v1686 = vmul.u32 %v1680, %v1682
    %v1687 = vshll.u32 %v1684, 16
    %v1688 = vshrl.u32 %v1684, 16
    %v1689 = vshll.u32 %v1685, 16
    %v1690 = vshrl.u32 %v1685, 16
    %vm1691 = vc.u32 %v1683, %v1687
    %v1692 = vsel %vm1691, 1, 0
    %v1693 = vadd.s32 %v1683, %v1687
    %v1694 = vadd.s32 %v1686, %v1692
    %vm1695 = vc.u32 %v1693, %v1689
    %v1696 = vsel %vm1695, 1, 0
    %v1697 = vadd.s32 %v1693, %v1689
    %v1698 = vadd.s32 %v1694, %v1696
    %v1699 = vadd.s32 %v1698, %v1688
    %v1700 = vadd.s32 %v1699, %v1690
    %v1701 = vand.u32 %v1678, 65535
    %v1702 = vshrl.u32 %v1678, 16
    %v1703 = vand.u32 %v1673, 65535
    %v1704 = vshrl.u32 %v1673, 16
    %v1705 = vmul.u32 %v1701, %v1703
    %v1706 = vmul.u32 %v1701, %v1704
    %v1707 = vmul.u32 %v1702, %v1703
    %v1708 = vmul.u32 %v1702, %v1704
    %v1709 = vshll.u32 %v1706, 16
    %v1710 = vshrl.u32 %v1706, 16
    %v1711 = vshll.u32 %v1707, 16
    %v1712 = vshrl.u32 %v1707, 16
    %vm1713 = vc.u32 %v1705, %v1709
    %v1714 = vsel %vm1713, 1, 0
    %v1715 = vadd.s32 %v1705, %v1709
    %v1716 = vadd.s32 %v1708, %v1714
    %vm1717 = vc.u32 %v1715, %v1711
    %v1718 = vsel %vm1717, 1, 0
    %v1719 = vadd.s32 %v1715, %v1711
    %v1720 = vadd.s32 %v1716, %v1718
    %v1721 = vadd.s32 %v1720, %v1710
    %v1722 = vadd.s32 %v1721, %v1712
    %v1723 = vmul.u32 %v1678, %v1669
    %v1724 = vadd.s32 %v1700, %v1719
    %vm1725 = vc.u32 %v1700, %v1719
    %v1726 = vadd.s32 %v1722, 1
    %v1727 = vsel %vm1725, %v1726, %v1722
    %v1728 = vadd.s32 %v1723, %v1727
    %v1729 = vadd.s32 %v1728, 536870912
    %v1730 = vshrl.u32 %v1729, 30
    %v1731 = vshll.u32 %v1730, 30
    %v1732 = vsub.s32 %v1728, %v1731
    %vm1733 = vcmp.lt.s32.totalorder %v1732, 0
    %v1734 = vsub.s32 0, %v1732
    %v1735 = vsel %vm1733, %v1734, %v1732
    %v1736 = vclz %v1735
    %v1737 = vsub.s32 %v1736, 2
    %vm1738 = vcmp.gt.s32.totalorder 0, %v1737
    %v1739 = vsel %vm1738, 0, %v1737
    %v1740 = vsub.s32 32, %v1739
    %v1741 = vshll.u32 %v1732, %v1739
    %v1742 = vshrl.u32 %v1724, %v1740
    %v1743 = vor.u32 %v1741, %v1742
    %v1744 = vsub.s32 4294967266, %v1739
    %v1745 = vadd.s32 %v1744, 127
    %v1746 = vshll.u32 %v1745, 23
    %v1747 = vor.u32 4788187, %v1746
    %v1748 = vand.u32 2147483647, %v1747
    %v1750 = vcvt.s32.f32 %v1743
    %v1751 = vmul.f32 %v1750, %v1748
    %v1752 = vxor.u32 %v1751, 2147483648
    %v1753 = vsel %vm1632, %v1752, %v1751
    %v1754 = vsub.s32 4, %v1730
    %v1755 = vsel %vm1632, %v1754, %v1730
    %v1756 = vsel %vm1631, %v228, %v1753
    %v1757 = vsel %vm1631, 0, %v1755
    %v1758 = vmul.f32 %v1756, %v1756
    %v1759 = vmul.f32 %v1758, -0.001358992
    %v1760 = vadd.f32 %v1759, 0.041655596
    %v1761 = vmul.f32 %v1758, %v1760
    %v1762 = vadd.f32 %v1761, -0.4999988
    %v1763 = vmul.f32 %v1758, %v1762
    %v1764 = vadd.f32 1.0, %v1763
    %v1765 = vmul.f32 %v1756, %v1756
    %v1766 = vmul.f32 %v1765, -0.00019511016
    %v1767 = vadd.f32 %v1766, 0.008332121
    %v1768 = vmul.f32 %v1765, %v1767
    %v1769 = vadd.f32 %v1768, -0.16666654
    %v1770 = vmul.f32 %v1765, %v1769
    %v1771 = vadd.f32 %v1770, 1.0
    %v1772 = vmul.f32 %v1771, %v1756
    %vm1773 = vweird.f32 %v228
    %v1774 = vadd.s32 %v1757, 3
    %v1775 = vand.u32 %v1774, 3
    %vm1776 = vcmp.lt.s32.totalorder %v1775, 2
    %vm1777 = vcmp.eq.s32.totalorder %v1775, 0
    %v1778 = vxor.u32 %v1772, 2147483648
    %v1779 = vsel %vm1777, %v1764, %v1778
    %vm1780 = vcmp.eq.s32.totalorder %v1775, 2
    %v1781 = vxor.u32 %v1764, 2147483648
    %v1782 = vsel %vm1780, %v1781, %v1772
    %v1783 = vsel %vm1776, %v1779, %v1782
    %v1784 = vsel %vm1773, nan, %v1783
    %v1785 = vand.u32 2147483647, %v229
    %vm1786 = vcmp.le.f32.partialorder %v1785, 0.7853982
    %vm1787 = vcmp.lt.s32.totalorder %v229, 0
    %v1788 = vand.u32 %v229, 2139095040
    %v1789 = vshrl.u32 %v1788, 23
    %v1790 = vsub.s32 %v1789, 127
    %v1791 = vand.u32 2147483647, %v229
    %v1792 = vand.u32 %v1791, 8388607
    %v1793 = vor.u32 %v1792, 8388608
    %v1794 = vsub.s32 0, %v1793
    %v1795 = vadd.s32 %v1790, 1
    %vm1796 = vcmp.gt.s32.totalorder %v1795, 0
    %v1797 = vsel %vm1796, %v1795, 0
    %v1798 = vshrl.u32 %v1797, 5
    %v1799 = vand.u32 %v1797, 31
    %v1800 = vsub.s32 32, %v1799
    %v1801 = vshrl.u32 683565275, %v1800
    %v1802 = vshll.u32 683565275, %v1799
    %v1803 = vshrl.u32 2475754826, %v1800
    %v1804 = vor.u32 %v1802, %v1803
    %v1805 = vshll.u32 2475754826, %v1799
    %v1806 = vshrl.u32 2131351028, %v1800
    %v1807 = vor.u32 %v1805, %v1806
    %v1808 = vshll.u32 2131351028, %v1799
    %v1809 = vshrl.u32 2102212464, %v1800
    %v1810 = vor.u32 %v1808, %v1809
    %v1811 = vshll.u32 2102212464, %v1799
    %v1812 = vshrl.u32 920167782, %v1800
    %v1813 = vor.u32 %v1811, %v1812
    %v1814 = vshll.u32 920167782, %v1799
    %v1815 = vshrl.u32 1326507024, %v1800
    %v1816 = vor.u32 %v1814, %v1815
    %vm1817 = vcmp.lt.s32.totalorder %v1798, 1
    %vm1818 = vcmp.lt.s32.totalorder %v1798, 2
    %vm1819 = vcmp.lt.s32.totalorder %v1798, 3
    %vm1820 = vcmp.lt.s32.totalorder %v1798, 4
    %v1821 = vsel %vm1817, %v1801, %v1804
    %v1822 = vsel %vm1820, %v1810, 2102212464
    %v1823 = vsel %vm1819, %v1807, %v1822
    %v1824 = vsel %vm1818, %v1821, %v1823
    %v1825 = vsel %vm1817, %v1804, %v1807
    %v1826 = vsel %vm1820, %v1813, 920167782
    %v1827 = vsel %vm1819, %v1810, %v1826
    %v1828 = vsel %vm1818, %v1825, %v1827
    %v1829 = vsel %vm1817, %v1807, %v1810
    %v1830 = vsel %vm1820, %v1816, 1326507024
    %v1831 = vsel %vm1819, %v1813, %v1830
    %v1832 = vsel %vm1818, %v1829, %v1831
    %v1833 = vshll.u32 %v1793, 8
    %v1834 = vand.u32 %v1833, 65535
    %v1835 = vshrl.u32 %v1833, 16
    %v1836 = vand.u32 %v1832, 65535
    %v1837 = vshrl.u32 %v1832, 16
    %v1838 = vmul.u32 %v1834, %v1836
    %v1839 = vmul.u32 %v1834, %v1837
    %v1840 = vmul.u32 %v1835, %v1836
    %v1841 = vmul.u32 %v1835, %v1837
    %v1842 = vshll.u32 %v1839, 16
    %v1843 = vshrl.u32 %v1839, 16
    %v1844 = vshll.u32 %v1840, 16
    %v1845 = vshrl.u32 %v1840, 16
    %vm1846 = vc.u32 %v1838, %v1842
    %v1847 = vsel %vm1846, 1, 0
    %v1848 = vadd.s32 %v1838, %v1842
    %v1849 = vadd.s32 %v1841, %v1847
    %vm1850 = vc.u32 %v1848, %v1844
    %v1851 = vsel %vm1850, 1, 0
    %v1852 = vadd.s32 %v1848, %v1844
    %v1853 = vadd.s32 %v1849, %v1851
    %v1854 = vadd.s32 %v1853, %v1843
    %v1855 = vadd.s32 %v1854, %v1845
    %v1856 = vand.u32 %v1833, 65535
    %v1857 = vshrl.u32 %v1833, 16
    %v1858 = vand.u32 %v1828, 65535
    %v1859 = vshrl.u32 %v1828, 16
    %v1860 = vmul.u32 %v1856, %v1858
    %v1861 = vmul.u32 %v1856, %v1859
    %v1862 = vmul.u32 %v1857, %v1858
    %v1863 = vmul.u32 %v1857, %v1859
    %v1864 = vshll.u32 %v1861, 16
    %v1865 = vshrl.u32 %v1861, 16
    %v1866 = vshll.u32 %v1862, 16
    %v1867 = vshrl.u32 %v1862, 16
    %vm1868 = vc.u32 %v1860, %v1864
    %v1869 = vsel %vm1868, 1, 0
    %v1870 = vadd.s32 %v1860, %v1864
    %v1871 = vadd.s32 %v1863, %v1869
    %vm1872 = vc.u32 %v1870, %v1866
    %v1873 = vsel %vm1872, 1, 0
    %v1874 = vadd.s32 %v1870, %v1866
    %v1875 = vadd.s32 %v1871, %v1873
    %v1876 = vadd.s32 %v1875, %v1865
    %v1877 = vadd.s32 %v1876, %v1867
    %v1878 = vmul.u32 %v1833, %v1824
    %v1879 = vadd.s32 %v1855, %v1874
    %vm1880 = vc.u32 %v1855, %v1874
    %v1881 = vadd.s32 %v1877, 1
    %v1882 = vsel %vm1880, %v1881, %v1877
    %v1883 = vadd.s32 %v1878, %v1882
    %v1884 = vadd.s32 %v1883, 536870912
    %v1885 = vshrl.u32 %v1884, 30
    %v1886 = vshll.u32 %v1885, 30
    %v1887 = vsub.s32 %v1883, %v1886
    %vm1888 = vcmp.lt.s32.totalorder %v1887, 0
    %v1889 = vsub.s32 0, %v1887
    %v1890 = vsel %vm1888, %v1889, %v1887
    %v1891 = vclz %v1890
    %v1892 = vsub.s32 %v1891, 2
    %vm1893 = vcmp.gt.s32.totalorder 0, %v1892
    %v1894 = vsel %vm1893, 0, %v1892
    %v1895 = vsub.s32 32, %v1894
    %v1896 = vshll.u32 %v1887, %v1894
    %v1897 = vshrl.u32 %v1879, %v1895
    %v1898 = vor.u32 %v1896, %v1897
    %v1899 = vsub.s32 4294967266, %v1894
    %v1900 = vadd.s32 %v1899, 127
    %v1901 = vshll.u32 %v1900, 23
    %v1902 = vor.u32 4788187, %v1901
    %v1903 = vand.u32 2147483647, %v1902
    %v1905 = vcvt.s32.f32 %v1898
    %v1906 = vmul.f32 %v1905, %v1903
    %v1907 = vxor.u32 %v1906, 2147483648
    %v1908 = vsel %vm1787, %v1907, %v1906
    %v1909 = vsub.s32 4, %v1885
    %v1910 = vsel %vm1787, %v1909, %v1885
    %v1911 = vsel %vm1786, %v229, %v1908
    %v1912 = vsel %vm1786, 0, %v1910
    %v1913 = vmul.f32 %v1911, %v1911
    %v1914 = vmul.f32 %v1913, -0.001358992
    %v1915 = vadd.f32 %v1914, 0.041655596
    %v1916 = vmul.f32 %v1913, %v1915
    %v1917 = vadd.f32 %v1916, -0.4999988
    %v1918 = vmul.f32 %v1913, %v1917
    %v1919 = vadd.f32 1.0, %v1918
    %v1920 = vmul.f32 %v1911, %v1911
    %v1921 = vmul.f32 %v1920, -0.00019511016
    %v1922 = vadd.f32 %v1921, 0.008332121
    %v1923 = vmul.f32 %v1920, %v1922
    %v1924 = vadd.f32 %v1923, -0.16666654
    %v1925 = vmul.f32 %v1920, %v1924
    %v1926 = vadd.f32 %v1925, 1.0
    %v1927 = vmul.f32 %v1926, %v1911
    %vm1928 = vweird.f32 %v229
    %v1929 = vadd.s32 %v1912, 3
    %v1930 = vand.u32 %v1929, 3
    %vm1931 = vcmp.lt.s32.totalorder %v1930, 2
    %vm1932 = vcmp.eq.s32.totalorder %v1930, 0
    %v1933 = vxor.u32 %v1927, 2147483648
    %v1934 = vsel %vm1932, %v1919, %v1933
    %vm1935 = vcmp.eq.s32.totalorder %v1930, 2
    %v1936 = vxor.u32 %v1919, 2147483648
    %v1937 = vsel %vm1935, %v1936, %v1927
    %v1938 = vsel %vm1931, %v1934, %v1937
    %v1939 = vsel %vm1928, nan, %v1938
    %v1940 = vand.u32 2147483647, %v230
    %vm1941 = vcmp.le.f32.partialorder %v1940, 0.7853982
    %vm1942 = vcmp.lt.s32.totalorder %v230, 0
    %v1943 = vand.u32 %v230, 2139095040
    %v1944 = vshrl.u32 %v1943, 23
    %v1945 = vsub.s32 %v1944, 127
    %v1946 = vand.u32 2147483647, %v230
    %v1947 = vand.u32 %v1946, 8388607
    %v1948 = vor.u32 %v1947, 8388608
    %v1949 = vsub.s32 0, %v1948
    %v1950 = vadd.s32 %v1945, 1
    %vm1951 = vcmp.gt.s32.totalorder %v1950, 0
    %v1952 = vsel %vm1951, %v1950, 0
    %v1953 = vshrl.u32 %v1952, 5
    %v1954 = vand.u32 %v1952, 31
    %v1955 = vsub.s32 32, %v1954
    %v1956 = vshrl.u32 683565275, %v1955
    %v1957 = vshll.u32 683565275, %v1954
    %v1958 = vshrl.u32 2475754826, %v1955
    %v1959 = vor.u32 %v1957, %v1958
    %v1960 = vshll.u32 2475754826, %v1954
    %v1961 = vshrl.u32 2131351028, %v1955
    %v1962 = vor.u32 %v1960, %v1961
    %v1963 = vshll.u32 2131351028, %v1954
    %v1964 = vshrl.u32 2102212464, %v1955
    %v1965 = vor.u32 %v1963, %v1964
    %v1966 = vshll.u32 2102212464, %v1954
    %v1967 = vshrl.u32 920167782, %v1955
    %v1968 = vor.u32 %v1966, %v1967
    %v1969 = vshll.u32 920167782, %v1954
    %v1970 = vshrl.u32 1326507024, %v1955
    %v1971 = vor.u32 %v1969, %v1970
    %vm1972 = vcmp.lt.s32.totalorder %v1953, 1
    %vm1973 = vcmp.lt.s32.totalorder %v1953, 2
    %vm1974 = vcmp.lt.s32.totalorder %v1953, 3
    %vm1975 = vcmp.lt.s32.totalorder %v1953, 4
    %v1976 = vsel %vm1972, %v1956, %v1959
    %v1977 = vsel %vm1975, %v1965, 2102212464
    %v1978 = vsel %vm1974, %v1962, %v1977
    %v1979 = vsel %vm1973, %v1976, %v1978
    %v1980 = vsel %vm1972, %v1959, %v1962
    %v1981 = vsel %vm1975, %v1968, 920167782
    %v1982 = vsel %vm1974, %v1965, %v1981
    %v1983 = vsel %vm1973, %v1980, %v1982
    %v1984 = vsel %vm1972, %v1962, %v1965
    %v1985 = vsel %vm1975, %v1971, 1326507024
    %v1986 = vsel %vm1974, %v1968, %v1985
    %v1987 = vsel %vm1973, %v1984, %v1986
    %v1988 = vshll.u32 %v1948, 8
    %v1989 = vand.u32 %v1988, 65535
    %v1990 = vshrl.u32 %v1988, 16
    %v1991 = vand.u32 %v1987, 65535
    %v1992 = vshrl.u32 %v1987, 16
    %v1993 = vmul.u32 %v1989, %v1991
    %v1994 = vmul.u32 %v1989, %v1992
    %v1995 = vmul.u32 %v1990, %v1991
    %v1996 = vmul.u32 %v1990, %v1992
    %v1997 = vshll.u32 %v1994, 16
    %v1998 = vshrl.u32 %v1994, 16
    %v1999 = vshll.u32 %v1995, 16
    %v2000 = vshrl.u32 %v1995, 16
    %vm2001 = vc.u32 %v1993, %v1997
    %v2002 = vsel %vm2001, 1, 0
    %v2003 = vadd.s32 %v1993, %v1997
    %v2004 = vadd.s32 %v1996, %v2002
    %vm2005 = vc.u32 %v2003, %v1999
    %v2006 = vsel %vm2005, 1, 0
    %v2007 = vadd.s32 %v2003, %v1999
    %v2008 = vadd.s32 %v2004, %v2006
    %v2009 = vadd.s32 %v2008, %v1998
    %v2010 = vadd.s32 %v2009, %v2000
    %v2011 = vand.u32 %v1988, 65535
    %v2012 = vshrl.u32 %v1988, 16
    %v2013 = vand.u32 %v1983, 65535
    %v2014 = vshrl.u32 %v1983, 16
    %v2015 = vmul.u32 %v2011, %v2013
    %v2016 = vmul.u32 %v2011, %v2014
    %v2017 = vmul.u32 %v2012, %v2013
    %v2018 = vmul.u32 %v2012, %v2014
    %v2019 = vshll.u32 %v2016, 16
    %v2020 = vshrl.u32 %v2016, 16
    %v2021 = vshll.u32 %v2017, 16
    %v2022 = vshrl.u32 %v2017, 16
    %vm2023 = vc.u32 %v2015, %v2019
    %v2024 = vsel %vm2023, 1, 0
    %v2025 = vadd.s32 %v2015, %v2019
    %v2026 = vadd.s32 %v2018, %v2024
    %vm2027 = vc.u32 %v2025, %v2021
    %v2028 = vsel %vm2027, 1, 0
    %v2029 = vadd.s32 %v2025, %v2021
    %v2030 = vadd.s32 %v2026, %v2028
    %v2031 = vadd.s32 %v2030, %v2020
    %v2032 = vadd.s32 %v2031, %v2022
    %v2033 = vmul.u32 %v1988, %v1979
    %v2034 = vadd.s32 %v2010, %v2029
    %vm2035 = vc.u32 %v2010, %v2029
    %v2036 = vadd.s32 %v2032, 1
    %v2037 = vsel %vm2035, %v2036, %v2032
    %v2038 = vadd.s32 %v2033, %v2037
    %v2039 = vadd.s32 %v2038, 536870912
    %v2040 = vshrl.u32 %v2039, 30
    %v2041 = vshll.u32 %v2040, 30
    %v2042 = vsub.s32 %v2038, %v2041
    %vm2043 = vcmp.lt.s32.totalorder %v2042, 0
    %v2044 = vsub.s32 0, %v2042
    %v2045 = vsel %vm2043, %v2044, %v2042
    %v2046 = vclz %v2045
    %v2047 = vsub.s32 %v2046, 2
    %vm2048 = vcmp.gt.s32.totalorder 0, %v2047
    %v2049 = vsel %vm2048, 0, %v2047
    %v2050 = vsub.s32 32, %v2049
    %v2051 = vshll.u32 %v2042, %v2049
    %v2052 = vshrl.u32 %v2034, %v2050
    %v2053 = vor.u32 %v2051, %v2052
    %v2054 = vsub.s32 4294967266, %v2049
    %v2055 = vadd.s32 %v2054, 127
    %v2056 = vshll.u32 %v2055, 23
    %v2057 = vor.u32 4788187, %v2056
    %v2058 = vand.u32 2147483647, %v2057
    %v2060 = vcvt.s32.f32 %v2053
    %v2061 = vmul.f32 %v2060, %v2058
    %v2062 = vxor.u32 %v2061, 2147483648
    %v2063 = vsel %vm1942, %v2062, %v2061
    %v2064 = vsub.s32 4, %v2040
    %v2065 = vsel %vm1942, %v2064, %v2040
    %v2066 = vsel %vm1941, %v230, %v2063
    %v2067 = vsel %vm1941, 0, %v2065
    %v2068 = vmul.f32 %v2066, %v2066
    %v2069 = vmul.f32 %v2068, -0.001358992
    %v2070 = vadd.f32 %v2069, 0.041655596
    %v2071 = vmul.f32 %v2068, %v2070
    %v2072 = vadd.f32 %v2071, -0.4999988
    %v2073 = vmul.f32 %v2068, %v2072
    %v2074 = vadd.f32 1.0, %v2073
    %v2075 = vmul.f32 %v2066, %v2066
    %v2076 = vmul.f32 %v2075, -0.00019511016
    %v2077 = vadd.f32 %v2076, 0.008332121
    %v2078 = vmul.f32 %v2075, %v2077
    %v2079 = vadd.f32 %v2078, -0.16666654
    %v2080 = vmul.f32 %v2075, %v2079
    %v2081 = vadd.f32 %v2080, 1.0
    %v2082 = vmul.f32 %v2081, %v2066
    %vm2083 = vweird.f32 %v230
    %v2084 = vadd.s32 %v2067, 3
    %v2085 = vand.u32 %v2084, 3
    %vm2086 = vcmp.lt.s32.totalorder %v2085, 2
    %vm2087 = vcmp.eq.s32.totalorder %v2085, 0
    %v2088 = vxor.u32 %v2082, 2147483648
    %v2089 = vsel %vm2087, %v2074, %v2088
    %vm2090 = vcmp.eq.s32.totalorder %v2085, 2
    %v2091 = vxor.u32 %v2074, 2147483648
    %v2092 = vsel %vm2090, %v2091, %v2082
    %v2093 = vsel %vm2086, %v2089, %v2092
    %v2094 = vsel %vm2083, nan, %v2093
    %v2095 = vand.u32 2147483647, %v231
    %vm2096 = vcmp.le.f32.partialorder %v2095, 0.7853982
    %vm2097 = vcmp.lt.s32.totalorder %v231, 0
    %v2098 = vand.u32 %v231, 2139095040
    %v2099 = vshrl.u32 %v2098, 23
    %v2100 = vsub.s32 %v2099, 127
    %v2101 = vand.u32 2147483647, %v231
    %v2102 = vand.u32 %v2101, 8388607
    %v2103 = vor.u32 %v2102, 8388608
    %v2104 = vsub.s32 0, %v2103
    %v2105 = vadd.s32 %v2100, 1
    %vm2106 = vcmp.gt.s32.totalorder %v2105, 0
    %v2107 = vsel %vm2106, %v2105, 0
    %v2108 = vshrl.u32 %v2107, 5
    %v2109 = vand.u32 %v2107, 31
    %v2110 = vsub.s32 32, %v2109
    %v2111 = vshrl.u32 683565275, %v2110
    %v2112 = vshll.u32 683565275, %v2109
    %v2113 = vshrl.u32 2475754826, %v2110
    %v2114 = vor.u32 %v2112, %v2113
    %v2115 = vshll.u32 2475754826, %v2109
    %v2116 = vshrl.u32 2131351028, %v2110
    %v2117 = vor.u32 %v2115, %v2116
    %v2118 = vshll.u32 2131351028, %v2109
    %v2119 = vshrl.u32 2102212464, %v2110
    %v2120 = vor.u32 %v2118, %v2119
    %v2121 = vshll.u32 2102212464, %v2109
    %v2122 = vshrl.u32 920167782, %v2110
    %v2123 = vor.u32 %v2121, %v2122
    %v2124 = vshll.u32 920167782, %v2109
    %v2125 = vshrl.u32 1326507024, %v2110
    %v2126 = vor.u32 %v2124, %v2125
    %vm2127 = vcmp.lt.s32.totalorder %v2108, 1
    %vm2128 = vcmp.lt.s32.totalorder %v2108, 2
    %vm2129 = vcmp.lt.s32.totalorder %v2108, 3
    %vm2130 = vcmp.lt.s32.totalorder %v2108, 4
    %v2131 = vsel %vm2127, %v2111, %v2114
    %v2132 = vsel %vm2130, %v2120, 2102212464
    %v2133 = vsel %vm2129, %v2117, %v2132
    %v2134 = vsel %vm2128, %v2131, %v2133
    %v2135 = vsel %vm2127, %v2114, %v2117
    %v2136 = vsel %vm2130, %v2123, 920167782
    %v2137 = vsel %vm2129, %v2120, %v2136
    %v2138 = vsel %vm2128, %v2135, %v2137
    %v2139 = vsel %vm2127, %v2117, %v2120
    %v2140 = vsel %vm2130, %v2126, 1326507024
    %v2141 = vsel %vm2129, %v2123, %v2140
    %v2142 = vsel %vm2128, %v2139, %v2141
    %v2143 = vshll.u32 %v2103, 8
    %v2144 = vand.u32 %v2143, 65535
    %v2145 = vshrl.u32 %v2143, 16
    %v2146 = vand.u32 %v2142, 65535
    %v2147 = vshrl.u32 %v2142, 16
    %v2148 = vmul.u32 %v2144, %v2146
    %v2149 = vmul.u32 %v2144, %v2147
    %v2150 = vmul.u32 %v2145, %v2146
    %v2151 = vmul.u32 %v2145, %v2147
    %v2152 = vshll.u32 %v2149, 16
    %v2153 = vshrl.u32 %v2149, 16
    %v2154 = vshll.u32 %v2150, 16
    %v2155 = vshrl.u32 %v2150, 16
    %vm2156 = vc.u32 %v2148, %v2152
    %v2157 = vsel %vm2156, 1, 0
    %v2158 = vadd.s32 %v2148, %v2152
    %v2159 = vadd.s32 %v2151, %v2157
    %vm2160 = vc.u32 %v2158, %v2154
    %v2161 = vsel %vm2160, 1, 0
    %v2162 = vadd.s32 %v2158, %v2154
    %v2163 = vadd.s32 %v2159, %v2161
    %v2164 = vadd.s32 %v2163, %v2153
    %v2165 = vadd.s32 %v2164, %v2155
    %v2166 = vand.u32 %v2143, 65535
    %v2167 = vshrl.u32 %v2143, 16
    %v2168 = vand.u32 %v2138, 65535
    %v2169 = vshrl.u32 %v2138, 16
    %v2170 = vmul.u32 %v2166, %v2168
    %v2171 = vmul.u32 %v2166, %v2169
    %v2172 = vmul.u32 %v2167, %v2168
    %v2173 = vmul.u32 %v2167, %v2169
    %v2174 = vshll.u32 %v2171, 16
    %v2175 = vshrl.u32 %v2171, 16
    %v2176 = vshll.u32 %v2172, 16
    %v2177 = vshrl.u32 %v2172, 16
    %vm2178 = vc.u32 %v2170, %v2174
    %v2179 = vsel %vm2178, 1, 0
    %v2180 = vadd.s32 %v2170, %v2174
    %v2181 = vadd.s32 %v2173, %v2179
    %vm2182 = vc.u32 %v2180, %v2176
    %v2183 = vsel %vm2182, 1, 0
    %v2184 = vadd.s32 %v2180, %v2176
    %v2185 = vadd.s32 %v2181, %v2183
    %v2186 = vadd.s32 %v2185, %v2175
    %v2187 = vadd.s32 %v2186, %v2177
    %v2188 = vmul.u32 %v2143, %v2134
    %v2189 = vadd.s32 %v2165, %v2184
    %vm2190 = vc.u32 %v2165, %v2184
    %v2191 = vadd.s32 %v2187, 1
    %v2192 = vsel %vm2190, %v2191, %v2187
    %v2193 = vadd.s32 %v2188, %v2192
    %v2194 = vadd.s32 %v2193, 536870912
    %v2195 = vshrl.u32 %v2194, 30
    %v2196 = vshll.u32 %v2195, 30
    %v2197 = vsub.s32 %v2193, %v2196
    %vm2198 = vcmp.lt.s32.totalorder %v2197, 0
    %v2199 = vsub.s32 0, %v2197
    %v2200 = vsel %vm2198, %v2199, %v2197
    %v2201 = vclz %v2200
    %v2202 = vsub.s32 %v2201, 2
    %vm2203 = vcmp.gt.s32.totalorder 0, %v2202
    %v2204 = vsel %vm2203, 0, %v2202
    %v2205 = vsub.s32 32, %v2204
    %v2206 = vshll.u32 %v2197, %v2204
    %v2207 = vshrl.u32 %v2189, %v2205
    %v2208 = vor.u32 %v2206, %v2207
    %v2209 = vsub.s32 4294967266, %v2204
    %v2210 = vadd.s32 %v2209, 127
    %v2211 = vshll.u32 %v2210, 23
    %v2212 = vor.u32 4788187, %v2211
    %v2213 = vand.u32 2147483647, %v2212
    %v2215 = vcvt.s32.f32 %v2208
    %v2216 = vmul.f32 %v2215, %v2213
    %v2217 = vxor.u32 %v2216, 2147483648
    %v2218 = vsel %vm2097, %v2217, %v2216
    %v2219 = vsub.s32 4, %v2195
    %v2220 = vsel %vm2097, %v2219, %v2195
    %v2221 = vsel %vm2096, %v231, %v2218
    %v2222 = vsel %vm2096, 0, %v2220
    %v2223 = vmul.f32 %v2221, %v2221
    %v2224 = vmul.f32 %v2223, -0.001358992
    %v2225 = vadd.f32 %v2224, 0.041655596
    %v2226 = vmul.f32 %v2223, %v2225
    %v2227 = vadd.f32 %v2226, -0.4999988
    %v2228 = vmul.f32 %v2223, %v2227
    %v2229 = vadd.f32 1.0, %v2228
    %v2230 = vmul.f32 %v2221, %v2221
    %v2231 = vmul.f32 %v2230, -0.00019511016
    %v2232 = vadd.f32 %v2231, 0.008332121
    %v2233 = vmul.f32 %v2230, %v2232
    %v2234 = vadd.f32 %v2233, -0.16666654
    %v2235 = vmul.f32 %v2230, %v2234
    %v2236 = vadd.f32 %v2235, 1.0
    %v2237 = vmul.f32 %v2236, %v2221
    %vm2238 = vweird.f32 %v231
    %v2239 = vadd.s32 %v2222, 3
    %v2240 = vand.u32 %v2239, 3
    %vm2241 = vcmp.lt.s32.totalorder %v2240, 2
    %vm2242 = vcmp.eq.s32.totalorder %v2240, 0
    %v2243 = vxor.u32 %v2237, 2147483648
    %v2244 = vsel %vm2242, %v2229, %v2243
    %vm2245 = vcmp.eq.s32.totalorder %v2240, 2
    %v2246 = vxor.u32 %v2229, 2147483648
    %v2247 = vsel %vm2245, %v2246, %v2237
    %v2248 = vsel %vm2241, %v2244, %v2247
    %v2249 = vsel %vm2238, nan, %v2248
    %v2250 = vand.u32 2147483647, %v232
    %vm2251 = vcmp.le.f32.partialorder %v2250, 0.7853982
    %vm2252 = vcmp.lt.s32.totalorder %v232, 0
    %v2253 = vand.u32 %v232, 2139095040
    %v2254 = vshrl.u32 %v2253, 23
    %v2255 = vsub.s32 %v2254, 127
    %v2256 = vand.u32 2147483647, %v232
    %v2257 = vand.u32 %v2256, 8388607
    %v2258 = vor.u32 %v2257, 8388608
    %v2259 = vsub.s32 0, %v2258
    %v2260 = vadd.s32 %v2255, 1
    %vm2261 = vcmp.gt.s32.totalorder %v2260, 0
    %v2262 = vsel %vm2261, %v2260, 0
    %v2263 = vshrl.u32 %v2262, 5
    %v2264 = vand.u32 %v2262, 31
    %v2265 = vsub.s32 32, %v2264
    %v2266 = vshrl.u32 683565275, %v2265
    %v2267 = vshll.u32 683565275, %v2264
    %v2268 = vshrl.u32 2475754826, %v2265
    %v2269 = vor.u32 %v2267, %v2268
    %v2270 = vshll.u32 2475754826, %v2264
    %v2271 = vshrl.u32 2131351028, %v2265
    %v2272 = vor.u32 %v2270, %v2271
    %v2273 = vshll.u32 2131351028, %v2264
    %v2274 = vshrl.u32 2102212464, %v2265
    %v2275 = vor.u32 %v2273, %v2274
    %v2276 = vshll.u32 2102212464, %v2264
    %v2277 = vshrl.u32 920167782, %v2265
    %v2278 = vor.u32 %v2276, %v2277
    %v2279 = vshll.u32 920167782, %v2264
    %v2280 = vshrl.u32 1326507024, %v2265
    %v2281 = vor.u32 %v2279, %v2280
    %vm2282 = vcmp.lt.s32.totalorder %v2263, 1
    %vm2283 = vcmp.lt.s32.totalorder %v2263, 2
    %vm2284 = vcmp.lt.s32.totalorder %v2263, 3
    %vm2285 = vcmp.lt.s32.totalorder %v2263, 4
    %v2286 = vsel %vm2282, %v2266, %v2269
    %v2287 = vsel %vm2285, %v2275, 2102212464
    %v2288 = vsel %vm2284, %v2272, %v2287
    %v2289 = vsel %vm2283, %v2286, %v2288
    %v2290 = vsel %vm2282, %v2269, %v2272
    %v2291 = vsel %vm2285, %v2278, 920167782
    %v2292 = vsel %vm2284, %v2275, %v2291
    %v2293 = vsel %vm2283, %v2290, %v2292
    %v2294 = vsel %vm2282, %v2272, %v2275
    %v2295 = vsel %vm2285, %v2281, 1326507024
    %v2296 = vsel %vm2284, %v2278, %v2295
    %v2297 = vsel %vm2283, %v2294, %v2296
    %v2298 = vshll.u32 %v2258, 8
    %v2299 = vand.u32 %v2298, 65535
    %v2300 = vshrl.u32 %v2298, 16
    %v2301 = vand.u32 %v2297, 65535
    %v2302 = vshrl.u32 %v2297, 16
    %v2303 = vmul.u32 %v2299, %v2301
    %v2304 = vmul.u32 %v2299, %v2302
    %v2305 = vmul.u32 %v2300, %v2301
    %v2306 = vmul.u32 %v2300, %v2302
    %v2307 = vshll.u32 %v2304, 16
    %v2308 = vshrl.u32 %v2304, 16
    %v2309 = vshll.u32 %v2305, 16
    %v2310 = vshrl.u32 %v2305, 16
    %vm2311 = vc.u32 %v2303, %v2307
    %v2312 = vsel %vm2311, 1, 0
    %v2313 = vadd.s32 %v2303, %v2307
    %v2314 = vadd.s32 %v2306, %v2312
    %vm2315 = vc.u32 %v2313, %v2309
    %v2316 = vsel %vm2315, 1, 0
    %v2317 = vadd.s32 %v2313, %v2309
    %v2318 = vadd.s32 %v2314, %v2316
    %v2319 = vadd.s32 %v2318, %v2308
    %v2320 = vadd.s32 %v2319, %v2310
    %v2321 = vand.u32 %v2298, 65535
    %v2322 = vshrl.u32 %v2298, 16
    %v2323 = vand.u32 %v2293, 65535
    %v2324 = vshrl.u32 %v2293, 16
    %v2325 = vmul.u32 %v2321, %v2323
    %v2326 = vmul.u32 %v2321, %v2324
    %v2327 = vmul.u32 %v2322, %v2323
    %v2328 = vmul.u32 %v2322, %v2324
    %v2329 = vshll.u32 %v2326, 16
    %v2330 = vshrl.u32 %v2326, 16
    %v2331 = vshll.u32 %v2327, 16
    %v2332 = vshrl.u32 %v2327, 16
    %vm2333 = vc.u32 %v2325, %v2329
    %v2334 = vsel %vm2333, 1, 0
    %v2335 = vadd.s32 %v2325, %v2329
    %v2336 = vadd.s32 %v2328, %v2334
    %vm2337 = vc.u32 %v2335, %v2331
    %v2338 = vsel %vm2337, 1, 0
    %v2339 = vadd.s32 %v2335, %v2331
    %v2340 = vadd.s32 %v2336, %v2338
    %v2341 = vadd.s32 %v2340, %v2330
    %v2342 = vadd.s32 %v2341, %v2332
    %v2343 = vmul.u32 %v2298, %v2289
    %v2344 = vadd.s32 %v2320, %v2339
    %vm2345 = vc.u32 %v2320, %v2339
    %v2346 = vadd.s32 %v2342, 1
    %v2347 = vsel %vm2345, %v2346, %v2342
    %v2348 = vadd.s32 %v2343, %v2347
    %v2349 = vadd.s32 %v2348, 536870912
    %v2350 = vshrl.u32 %v2349, 30
    %v2351 = vshll.u32 %v2350, 30
    %v2352 = vsub.s32 %v2348, %v2351
    %vm2353 = vcmp.lt.s32.totalorder %v2352, 0
    %v2354 = vsub.s32 0, %v2352
    %v2355 = vsel %vm2353, %v2354, %v2352
    %v2356 = vclz %v2355
    %v2357 = vsub.s32 %v2356, 2
    %vm2358 = vcmp.gt.s32.totalorder 0, %v2357
    %v2359 = vsel %vm2358, 0, %v2357
    %v2360 = vsub.s32 32, %v2359
    %v2361 = vshll.u32 %v2352, %v2359
    %v2362 = vshrl.u32 %v2344, %v2360
    %v2363 = vor.u32 %v2361, %v2362
    %v2364 = vsub.s32 4294967266, %v2359
    %v2365 = vadd.s32 %v2364, 127
    %v2366 = vshll.u32 %v2365, 23
    %v2367 = vor.u32 4788187, %v2366
    %v2368 = vand.u32 2147483647, %v2367
    %v2370 = vcvt.s32.f32 %v2363
    %v2371 = vmul.f32 %v2370, %v2368
    %v2372 = vxor.u32 %v2371, 2147483648
    %v2373 = vsel %vm2252, %v2372, %v2371
    %v2374 = vsub.s32 4, %v2350
    %v2375 = vsel %vm2252, %v2374, %v2350
    %v2376 = vsel %vm2251, %v232, %v2373
    %v2377 = vsel %vm2251, 0, %v2375
    %v2378 = vmul.f32 %v2376, %v2376
    %v2379 = vmul.f32 %v2378, -0.001358992
    %v2380 = vadd.f32 %v2379, 0.041655596
    %v2381 = vmul.f32 %v2378, %v2380
    %v2382 = vadd.f32 %v2381, -0.4999988
    %v2383 = vmul.f32 %v2378, %v2382
    %v2384 = vadd.f32 1.0, %v2383
    %v2385 = vmul.f32 %v2376, %v2376
    %v2386 = vmul.f32 %v2385, -0.00019511016
    %v2387 = vadd.f32 %v2386, 0.008332121
    %v2388 = vmul.f32 %v2385, %v2387
    %v2389 = vadd.f32 %v2388, -0.16666654
    %v2390 = vmul.f32 %v2385, %v2389
    %v2391 = vadd.f32 %v2390, 1.0
    %v2392 = vmul.f32 %v2391, %v2376
    %vm2393 = vweird.f32 %v232
    %v2394 = vadd.s32 %v2377, 3
    %v2395 = vand.u32 %v2394, 3
    %vm2396 = vcmp.lt.s32.totalorder %v2395, 2
    %vm2397 = vcmp.eq.s32.totalorder %v2395, 0
    %v2398 = vxor.u32 %v2392, 2147483648
    %v2399 = vsel %vm2397, %v2384, %v2398
    %vm2400 = vcmp.eq.s32.totalorder %v2395, 2
    %v2401 = vxor.u32 %v2384, 2147483648
    %v2402 = vsel %vm2400, %v2401, %v2392
    %v2403 = vsel %vm2396, %v2399, %v2402
    %v2404 = vsel %vm2393, nan, %v2403
    %v2405 = vand.u32 2147483647, %v233
    %vm2406 = vcmp.le.f32.partialorder %v2405, 0.7853982
    %vm2407 = vcmp.lt.s32.totalorder %v233, 0
    %v2408 = vand.u32 %v233, 2139095040
    %v2409 = vshrl.u32 %v2408, 23
    %v2410 = vsub.s32 %v2409, 127
    %v2411 = vand.u32 2147483647, %v233
    %v2412 = vand.u32 %v2411, 8388607
    %v2413 = vor.u32 %v2412, 8388608
    %v2414 = vsub.s32 0, %v2413
    %v2415 = vadd.s32 %v2410, 1
    %vm2416 = vcmp.gt.s32.totalorder %v2415, 0
    %v2417 = vsel %vm2416, %v2415, 0
    %v2418 = vshrl.u32 %v2417, 5
    %v2419 = vand.u32 %v2417, 31
    %v2420 = vsub.s32 32, %v2419
    %v2421 = vshrl.u32 683565275, %v2420
    %v2422 = vshll.u32 683565275, %v2419
    %v2423 = vshrl.u32 2475754826, %v2420
    %v2424 = vor.u32 %v2422, %v2423
    %v2425 = vshll.u32 2475754826, %v2419
    %v2426 = vshrl.u32 2131351028, %v2420
    %v2427 = vor.u32 %v2425, %v2426
    %v2428 = vshll.u32 2131351028, %v2419
    %v2429 = vshrl.u32 2102212464, %v2420
    %v2430 = vor.u32 %v2428, %v2429
    %v2431 = vshll.u32 2102212464, %v2419
    %v2432 = vshrl.u32 920167782, %v2420
    %v2433 = vor.u32 %v2431, %v2432
    %v2434 = vshll.u32 920167782, %v2419
    %v2435 = vshrl.u32 1326507024, %v2420
    %v2436 = vor.u32 %v2434, %v2435
    %vm2437 = vcmp.lt.s32.totalorder %v2418, 1
    %vm2438 = vcmp.lt.s32.totalorder %v2418, 2
    %vm2439 = vcmp.lt.s32.totalorder %v2418, 3
    %vm2440 = vcmp.lt.s32.totalorder %v2418, 4
    %v2441 = vsel %vm2437, %v2421, %v2424
    %v2442 = vsel %vm2440, %v2430, 2102212464
    %v2443 = vsel %vm2439, %v2427, %v2442
    %v2444 = vsel %vm2438, %v2441, %v2443
    %v2445 = vsel %vm2437, %v2424, %v2427
    %v2446 = vsel %vm2440, %v2433, 920167782
    %v2447 = vsel %vm2439, %v2430, %v2446
    %v2448 = vsel %vm2438, %v2445, %v2447
    %v2449 = vsel %vm2437, %v2427, %v2430
    %v2450 = vsel %vm2440, %v2436, 1326507024
    %v2451 = vsel %vm2439, %v2433, %v2450
    %v2452 = vsel %vm2438, %v2449, %v2451
    %v2453 = vshll.u32 %v2413, 8
    %v2454 = vand.u32 %v2453, 65535
    %v2455 = vshrl.u32 %v2453, 16
    %v2456 = vand.u32 %v2452, 65535
    %v2457 = vshrl.u32 %v2452, 16
    %v2458 = vmul.u32 %v2454, %v2456
    %v2459 = vmul.u32 %v2454, %v2457
    %v2460 = vmul.u32 %v2455, %v2456
    %v2461 = vmul.u32 %v2455, %v2457
    %v2462 = vshll.u32 %v2459, 16
    %v2463 = vshrl.u32 %v2459, 16
    %v2464 = vshll.u32 %v2460, 16
    %v2465 = vshrl.u32 %v2460, 16
    %vm2466 = vc.u32 %v2458, %v2462
    %v2467 = vsel %vm2466, 1, 0
    %v2468 = vadd.s32 %v2458, %v2462
    %v2469 = vadd.s32 %v2461, %v2467
    %vm2470 = vc.u32 %v2468, %v2464
    %v2471 = vsel %vm2470, 1, 0
    %v2472 = vadd.s32 %v2468, %v2464
    %v2473 = vadd.s32 %v2469, %v2471
    %v2474 = vadd.s32 %v2473, %v2463
    %v2475 = vadd.s32 %v2474, %v2465
    %v2476 = vand.u32 %v2453, 65535
    %v2477 = vshrl.u32 %v2453, 16
    %v2478 = vand.u32 %v2448, 65535
    %v2479 = vshrl.u32 %v2448, 16
    %v2480 = vmul.u32 %v2476, %v2478
    %v2481 = vmul.u32 %v2476, %v2479
    %v2482 = vmul.u32 %v2477, %v2478
    %v2483 = vmul.u32 %v2477, %v2479
    %v2484 = vshll.u32 %v2481, 16
    %v2485 = vshrl.u32 %v2481, 16
    %v2486 = vshll.u32 %v2482, 16
    %v2487 = vshrl.u32 %v2482, 16
    %vm2488 = vc.u32 %v2480, %v2484
    %v2489 = vsel %vm2488, 1, 0
    %v2490 = vadd.s32 %v2480, %v2484
    %v2491 = vadd.s32 %v2483, %v2489
    %vm2492 = vc.u32 %v2490, %v2486
    %v2493 = vsel %vm2492, 1, 0
    %v2494 = vadd.s32 %v2490, %v2486
    %v2495 = vadd.s32 %v2491, %v2493
    %v2496 = vadd.s32 %v2495, %v2485
    %v2497 = vadd.s32 %v2496, %v2487
    %v2498 = vmul.u32 %v2453, %v2444
    %v2499 = vadd.s32 %v2475, %v2494
    %vm2500 = vc.u32 %v2475, %v2494
    %v2501 = vadd.s32 %v2497, 1
    %v2502 = vsel %vm2500, %v2501, %v2497
    %v2503 = vadd.s32 %v2498, %v2502
    %v2504 = vadd.s32 %v2503, 536870912
    %v2505 = vshrl.u32 %v2504, 30
    %v2506 = vshll.u32 %v2505, 30
    %v2507 = vsub.s32 %v2503, %v2506
    %vm2508 = vcmp.lt.s32.totalorder %v2507, 0
    %v2509 = vsub.s32 0, %v2507
    %v2510 = vsel %vm2508, %v2509, %v2507
    %v2511 = vclz %v2510
    %v2512 = vsub.s32 %v2511, 2
    %vm2513 = vcmp.gt.s32.totalorder 0, %v2512
    %v2514 = vsel %vm2513, 0, %v2512
    %v2515 = vsub.s32 32, %v2514
    %v2516 = vshll.u32 %v2507, %v2514
    %v2517 = vshrl.u32 %v2499, %v2515
    %v2518 = vor.u32 %v2516, %v2517
    %v2519 = vsub.s32 4294967266, %v2514
    %v2520 = vadd.s32 %v2519, 127
    %v2521 = vshll.u32 %v2520, 23
    %v2522 = vor.u32 4788187, %v2521
    %v2523 = vand.u32 2147483647, %v2522
    %v2525 = vcvt.s32.f32 %v2518
    %v2526 = vmul.f32 %v2525, %v2523
    %v2527 = vxor.u32 %v2526, 2147483648
    %v2528 = vsel %vm2407, %v2527, %v2526
    %v2529 = vsub.s32 4, %v2505
    %v2530 = vsel %vm2407, %v2529, %v2505
    %v2531 = vsel %vm2406, %v233, %v2528
    %v2532 = vsel %vm2406, 0, %v2530
    %v2533 = vmul.f32 %v2531, %v2531
    %v2534 = vmul.f32 %v2533, -0.001358992
    %v2535 = vadd.f32 %v2534, 0.041655596
    %v2536 = vmul.f32 %v2533, %v2535
    %v2537 = vadd.f32 %v2536, -0.4999988
    %v2538 = vmul.f32 %v2533, %v2537
    %v2539 = vadd.f32 1.0, %v2538
    %v2540 = vmul.f32 %v2531, %v2531
    %v2541 = vmul.f32 %v2540, -0.00019511016
    %v2542 = vadd.f32 %v2541, 0.008332121
    %v2543 = vmul.f32 %v2540, %v2542
    %v2544 = vadd.f32 %v2543, -0.16666654
    %v2545 = vmul.f32 %v2540, %v2544
    %v2546 = vadd.f32 %v2545, 1.0
    %v2547 = vmul.f32 %v2546, %v2531
    %vm2548 = vweird.f32 %v233
    %v2549 = vadd.s32 %v2532, 3
    %v2550 = vand.u32 %v2549, 3
    %vm2551 = vcmp.lt.s32.totalorder %v2550, 2
    %vm2552 = vcmp.eq.s32.totalorder %v2550, 0
    %v2553 = vxor.u32 %v2547, 2147483648
    %v2554 = vsel %vm2552, %v2539, %v2553
    %vm2555 = vcmp.eq.s32.totalorder %v2550, 2
    %v2556 = vxor.u32 %v2539, 2147483648
    %v2557 = vsel %vm2555, %v2556, %v2547
    %v2558 = vsel %vm2551, %v2554, %v2557
    %v2559 = vsel %vm2548, nan, %v2558
    %v2560 = vand.u32 2147483647, %v234
    %vm2561 = vcmp.le.f32.partialorder %v2560, 0.7853982
    %vm2562 = vcmp.lt.s32.totalorder %v234, 0
    %v2563 = vand.u32 %v234, 2139095040
    %v2564 = vshrl.u32 %v2563, 23
    %v2565 = vsub.s32 %v2564, 127
    %v2566 = vand.u32 2147483647, %v234
    %v2567 = vand.u32 %v2566, 8388607
    %v2568 = vor.u32 %v2567, 8388608
    %v2569 = vsub.s32 0, %v2568
    %v2570 = vadd.s32 %v2565, 1
    %vm2571 = vcmp.gt.s32.totalorder %v2570, 0
    %v2572 = vsel %vm2571, %v2570, 0
    %v2573 = vshrl.u32 %v2572, 5
    %v2574 = vand.u32 %v2572, 31
    %v2575 = vsub.s32 32, %v2574
    %v2576 = vshrl.u32 683565275, %v2575
    %v2577 = vshll.u32 683565275, %v2574
    %v2578 = vshrl.u32 2475754826, %v2575
    %v2579 = vor.u32 %v2577, %v2578
    %v2580 = vshll.u32 2475754826, %v2574
    %v2581 = vshrl.u32 2131351028, %v2575
    %v2582 = vor.u32 %v2580, %v2581
    %v2583 = vshll.u32 2131351028, %v2574
    %v2584 = vshrl.u32 2102212464, %v2575
    %v2585 = vor.u32 %v2583, %v2584
    %v2586 = vshll.u32 2102212464, %v2574
    %v2587 = vshrl.u32 920167782, %v2575
    %v2588 = vor.u32 %v2586, %v2587
    %v2589 = vshll.u32 920167782, %v2574
    %v2590 = vshrl.u32 1326507024, %v2575
    %v2591 = vor.u32 %v2589, %v2590
    %vm2592 = vcmp.lt.s32.totalorder %v2573, 1
    %vm2593 = vcmp.lt.s32.totalorder %v2573, 2
    %vm2594 = vcmp.lt.s32.totalorder %v2573, 3
    %vm2595 = vcmp.lt.s32.totalorder %v2573, 4
    %v2596 = vsel %vm2592, %v2576, %v2579
    %v2597 = vsel %vm2595, %v2585, 2102212464
    %v2598 = vsel %vm2594, %v2582, %v2597
    %v2599 = vsel %vm2593, %v2596, %v2598
    %v2600 = vsel %vm2592, %v2579, %v2582
    %v2601 = vsel %vm2595, %v2588, 920167782
    %v2602 = vsel %vm2594, %v2585, %v2601
    %v2603 = vsel %vm2593, %v2600, %v2602
    %v2604 = vsel %vm2592, %v2582, %v2585
    %v2605 = vsel %vm2595, %v2591, 1326507024
    %v2606 = vsel %vm2594, %v2588, %v2605
    %v2607 = vsel %vm2593, %v2604, %v2606
    %v2608 = vshll.u32 %v2568, 8
    %v2609 = vand.u32 %v2608, 65535
    %v2610 = vshrl.u32 %v2608, 16
    %v2611 = vand.u32 %v2607, 65535
    %v2612 = vshrl.u32 %v2607, 16
    %v2613 = vmul.u32 %v2609, %v2611
    %v2614 = vmul.u32 %v2609, %v2612
    %v2615 = vmul.u32 %v2610, %v2611
    %v2616 = vmul.u32 %v2610, %v2612
    %v2617 = vshll.u32 %v2614, 16
    %v2618 = vshrl.u32 %v2614, 16
    %v2619 = vshll.u32 %v2615, 16
    %v2620 = vshrl.u32 %v2615, 16
    %vm2621 = vc.u32 %v2613, %v2617
    %v2622 = vsel %vm2621, 1, 0
    %v2623 = vadd.s32 %v2613, %v2617
    %v2624 = vadd.s32 %v2616, %v2622
    %vm2625 = vc.u32 %v2623, %v2619
    %v2626 = vsel %vm2625, 1, 0
    %v2627 = vadd.s32 %v2623, %v2619
    %v2628 = vadd.s32 %v2624, %v2626
    %v2629 = vadd.s32 %v2628, %v2618
    %v2630 = vadd.s32 %v2629, %v2620
    %v2631 = vand.u32 %v2608, 65535
    %v2632 = vshrl.u32 %v2608, 16
    %v2633 = vand.u32 %v2603, 65535
    %v2634 = vshrl.u32 %v2603, 16
    %v2635 = vmul.u32 %v2631, %v2633
    %v2636 = vmul.u32 %v2631, %v2634
    %v2637 = vmul.u32 %v2632, %v2633
    %v2638 = vmul.u32 %v2632, %v2634
    %v2639 = vshll.u32 %v2636, 16
    %v2640 = vshrl.u32 %v2636, 16
    %v2641 = vshll.u32 %v2637, 16
    %v2642 = vshrl.u32 %v2637, 16
    %vm2643 = vc.u32 %v2635, %v2639
    %v2644 = vsel %vm2643, 1, 0
    %v2645 = vadd.s32 %v2635, %v2639
    %v2646 = vadd.s32 %v2638, %v2644
    %vm2647 = vc.u32 %v2645, %v2641
    %v2648 = vsel %vm2647, 1, 0
    %v2649 = vadd.s32 %v2645, %v2641
    %v2650 = vadd.s32 %v2646, %v2648
    %v2651 = vadd.s32 %v2650, %v2640
    %v2652 = vadd.s32 %v2651, %v2642
    %v2653 = vmul.u32 %v2608, %v2599
    %v2654 = vadd.s32 %v2630, %v2649
    %vm2655 = vc.u32 %v2630, %v2649
    %v2656 = vadd.s32 %v2652, 1
    %v2657 = vsel %vm2655, %v2656, %v2652
    %v2658 = vadd.s32 %v2653, %v2657
    %v2659 = vadd.s32 %v2658, 536870912
    %v2660 = vshrl.u32 %v2659, 30
    %v2661 = vshll.u32 %v2660, 30
    %v2662 = vsub.s32 %v2658, %v2661
    %vm2663 = vcmp.lt.s32.totalorder %v2662, 0
    %v2664 = vsub.s32 0, %v2662
    %v2665 = vsel %vm2663, %v2664, %v2662
    %v2666 = vclz %v2665
    %v2667 = vsub.s32 %v2666, 2
    %vm2668 = vcmp.gt.s32.totalorder 0, %v2667
    %v2669 = vsel %vm2668, 0, %v2667
    %v2670 = vsub.s32 32, %v2669
    %v2671 = vshll.u32 %v2662, %v2669
    %v2672 = vshrl.u32 %v2654, %v2670
    %v2673 = vor.u32 %v2671, %v2672
    %v2674 = vsub.s32 4294967266, %v2669
    %v2675 = vadd.s32 %v2674, 127
    %v2676 = vshll.u32 %v2675, 23
    %v2677 = vor.u32 4788187, %v2676
    %v2678 = vand.u32 2147483647, %v2677
    %v2680 = vcvt.s32.f32 %v2673
    %v2681 = vmul.f32 %v2680, %v2678
    %v2682 = vxor.u32 %v2681, 2147483648
    %v2683 = vsel %vm2562, %v2682, %v2681
    %v2684 = vsub.s32 4, %v2660
    %v2685 = vsel %vm2562, %v2684, %v2660
    %v2686 = vsel %vm2561, %v234, %v2683
    %v2687 = vsel %vm2561, 0, %v2685
    %v2688 = vmul.f32 %v2686, %v2686
    %v2689 = vmul.f32 %v2688, -0.001358992
    %v2690 = vadd.f32 %v2689, 0.041655596
    %v2691 = vmul.f32 %v2688, %v2690
    %v2692 = vadd.f32 %v2691, -0.4999988
    %v2693 = vmul.f32 %v2688, %v2692
    %v2694 = vadd.f32 1.0, %v2693
    %v2695 = vmul.f32 %v2686, %v2686
    %v2696 = vmul.f32 %v2695, -0.00019511016
    %v2697 = vadd.f32 %v2696, 0.008332121
    %v2698 = vmul.f32 %v2695, %v2697
    %v2699 = vadd.f32 %v2698, -0.16666654
    %v2700 = vmul.f32 %v2695, %v2699
    %v2701 = vadd.f32 %v2700, 1.0
    %v2702 = vmul.f32 %v2701, %v2686
    %vm2703 = vweird.f32 %v234
    %v2704 = vadd.s32 %v2687, 3
    %v2705 = vand.u32 %v2704, 3
    %vm2706 = vcmp.lt.s32.totalorder %v2705, 2
    %vm2707 = vcmp.eq.s32.totalorder %v2705, 0
    %v2708 = vxor.u32 %v2702, 2147483648
    %v2709 = vsel %vm2707, %v2694, %v2708
    %vm2710 = vcmp.eq.s32.totalorder %v2705, 2
    %v2711 = vxor.u32 %v2694, 2147483648
    %v2712 = vsel %vm2710, %v2711, %v2702
    %v2713 = vsel %vm2706, %v2709, %v2712
    %v2714 = vsel %vm2703, nan, %v2713
    %2715 = vst [vmem:[#allocation7] sm:$0xff] %v389
    %2716 = vst [vmem:[#allocation7 + $0x8] sm:$0xff] %v544
    %2717 = vst [vmem:[#allocation7 + $0x10] sm:$0xff] %v699
    %2718 = vst [vmem:[#allocation7 + $0x18] sm:$0xff] %v854
    %2719 = vst [vmem:[#allocation7 + $0x20] sm:$0xff] %v1009
    %2720 = vst [vmem:[#allocation7 + $0x28] sm:$0xff] %v1164
    %2721 = vst [vmem:[#allocation7 + $0x30] sm:$0xff] %v1319
    %2722 = vst [vmem:[#allocation7 + $0x38] sm:$0xff] %v1474
    %2723 = vst [vmem:[#allocation7 + $0x40] sm:$0xff] %v1629
    %2724 = vst [vmem:[#allocation7 + $0x48] sm:$0xff] %v1784
    %2725 = vst [vmem:[#allocation7 + $0x50] sm:$0xff] %v1939
    %2726 = vst [vmem:[#allocation7 + $0x58] sm:$0xff] %v2094
    %2727 = vst [vmem:[#allocation7 + $0x60] sm:$0xff] %v2249
    %2728 = vst [vmem:[#allocation7 + $0x68] sm:$0xff] %v2404
    %2729 = vst [vmem:[#allocation7 + $0x70] sm:$0xff] %v2559
    %2730 = vst [vmem:[#allocation7 + $0x78] sm:$0xff] %v2714
    // Predicated region
    $region26: #{tpu_custom_call.1} parent=1 // pred_check
      _
    $region27: #{tpu_custom_call.1} parent=1 // pred_check_branch
      %2732 = sbr.rel (0) target = $region29
    $region28: #{tpu_custom_call.1} parent=1 // pred_region
      %2734 = vsyncadd [#allocation4], 0
      %s2735 = sshll.u32 [#allocation7], 4
      %s2736 = int_to_ptr.vmem [resolvable:$true] %s2735
      %s2737 = sshll.u32 %s4, 4
      %s2738 = int_to_ptr.hbm [resolvable:$true] %s2737
      %2743 = dma.vmem_to_hbm [thread:$0]  %s2736, 2048, %s2738, [#allocation4], 128, 128, 8
    $region29: #{tpu_custom_call.1} parent=1 // pred_fallthru
      _
    // Predicated region
    $region30: #{tpu_custom_call.1} parent=1 // pred_check
      _
    $region31: #{tpu_custom_call.1} parent=1 // pred_check_branch
      %2745 = sbr.rel (0) target = $region33
    $region32: #{tpu_custom_call.1} parent=1 // pred_region
      %2747 = dma.done [#allocation4], 2048
    $region33: #{tpu_custom_call.1} parent=1 // pred_fallthru
      _
    %2748 = vsyncpa [#allocation3], 1
    %2749 = vsyncpa [#allocation6], 1
    %2750 = vsyncpa [#allocation4], 1

</llo_original>
